<compile_context>
chip_gen: v7x
topology: tpu7x:2x2x1
jax: 0.10.0
libtpu: 0.0.40
codegen_flags: <defaults>
</compile_context>

<pallas_src>
import jax
import jax.numpy as jnp
from jax.experimental import pallas as pl
from jax.experimental.pallas import tpu as pltpu


# ----------------------------------------------------------------------------
# Kernel 1: tiled per-segment mean pooling, then (at the last grid step)
#           linear2 (Linear+ReLU) and the BN-folded segment-side projection.
#   x tile:   (tm, C)
#   starts:   (1, B)  segment start row
#   ends:     (1, B)  segment end row (exclusive)
#   invc:     (1, B)  1 / segment size (0 for empty segments)
#   w2t:      (C, C)  linear2 weight transposed (in x out)
#   b2:       (1, C)
#   w1bf:     (C, C)  BN-folded half of linear1 acting on the pooled features
#   out t:    (B, C)  relu(mean @ w2t + b2) @ w1bf   (resident accumulator out)
#   scratch:  (B, C)  f32 running segment means
# ----------------------------------------------------------------------------
def seg_pool_linear2_kernel(x_ref, starts_ref, ends_ref, invc_ref,
                            w2t_ref, b2_ref, w1bf_ref, t_ref, acc_ref):
    tm = x_ref.shape[0]
    b = starts_ref.shape[1]
    pid = pl.program_id(0)

    @pl.when(pid == 0)
    def _():
        acc_ref[...] = jnp.zeros_like(acc_ref)

    base = pid * tm
    row = base + jax.lax.broadcasted_iota(jnp.int32, (tm, b), 0)   # global rows
    member = (row >= starts_ref[...]) & (row < ends_ref[...])
    # 1/count folded into the membership matrix -> matmul yields means directly
    onehot = jnp.where(member, invc_ref[...], 0.0).astype(jnp.float32)  # (tm,B)

    acc_ref[...] += jax.lax.dot_general(
        onehot, x_ref[...].astype(jnp.float32),
        dimension_numbers=(((0,), (0,)), ((), ())),
        preferred_element_type=jnp.float32)                        # (B, C)

    @pl.when(pid == pl.num_programs(0) - 1)
    def _():
        g = jnp.maximum(
            jnp.dot(acc_ref[...], w2t_ref[...],
                    preferred_element_type=jnp.float32) + b2_ref[...],
            0.0)                                                   # linear2+ReLU
        t_ref[...] = jnp.dot(g, w1bf_ref[...],
                             preferred_element_type=jnp.float32)   # hoisted w1b


# ----------------------------------------------------------------------------
# Kernel 2: per-row output, concat-free and BN-folded.
#   y[r] = relu( x[r] @ w1a_fold + t[seg(r)] + b_fold )
# where t = relu(linear2(mean)) @ w1b_fold was computed by kernel 1.
# ----------------------------------------------------------------------------
def rowwise_kernel(x_ref, t_ref, starts_ref, ends_ref,
                   w1af_ref, bf_ref, o_ref):
    tm = x_ref.shape[0]
    b = starts_ref.shape[1]
    base = pl.program_id(0) * tm
    row = base + jax.lax.broadcasted_iota(jnp.int32, (tm, b), 0)
    member = (row >= starts_ref[...]) & (row < ends_ref[...])
    onehot = jnp.where(member, 1.0, 0.0).astype(jnp.float32)       # (tm, B)

    z = jnp.dot(x_ref[...], w1af_ref[...],
                preferred_element_type=jnp.float32) \
        + jnp.dot(onehot, t_ref[...], preferred_element_type=jnp.float32) \
        + bf_ref[...]
    o_ref[...] = jnp.maximum(z, 0.0).astype(o_ref.dtype)


# ----------------------------------------------------------------------------
# Wrapper
# ----------------------------------------------------------------------------
def transition_up(x, offsets, params, *, tm=1024, eps=1e-5):
    """x: (N, C) float32, offsets: (B,) int32 cumulative point counts."""
    n, c = x.shape
    b = offsets.shape[0]

    starts = jnp.concatenate([jnp.zeros((1,), jnp.int32), offsets[:-1]])
    ends = offsets
    counts = (ends - starts).astype(jnp.float32)
    inv_counts = jnp.where(counts > 0, 1.0 / jnp.maximum(counts, 1.0), 0.0)

    starts2d = starts.reshape(1, b)
    ends2d = ends.reshape(1, b)
    invc2d = inv_counts.reshape(1, b)

    w1, b1, w2, b2 = params["w1"], params["b1"], params["w2"], params["b2"]
    gamma, beta = params["gamma"], params["beta"]
    rmean, rvar = params["rmean"], params["rvar"]

    # Fold eval-mode BN into linear1.
    bn_scale = gamma / jnp.sqrt(rvar + eps)          # (C,)
    bn_shift = beta - rmean * bn_scale               # (C,)
    w1a_fold = w1[:, :c].T * bn_scale[None, :]       # (C, C) on point features
    w1b_fold = w1[:, c:].T * bn_scale[None, :]       # (C, C) on pooled features
    b_fold = (b1 * bn_scale + bn_shift).reshape(1, c)
    w2_t = w2.T                                      # (C, C)
    b2_2d = b2.reshape(1, c)

    # Pad rows to a multiple of tm (padded rows belong to no segment and are
    # sliced off at the end).
    n_tiles = pl.cdiv(n, tm)
    n_pad = n_tiles * tm
    if n_pad != n:
        x_p = jnp.concatenate([x, jnp.zeros((n_pad - n, c), x.dtype)], axis=0)
    else:
        x_p = x
    grid = (n_tiles,)

    # --- kernel 1: tiled segment-mean accumulation + linear2 + w1b fold ------
    t = pl.pallas_call(
        seg_pool_linear2_kernel,
        out_shape=jax.ShapeDtypeStruct((b, c), jnp.float32),
        grid=grid,
        in_specs=[
            pl.BlockSpec((tm, c), lambda i: (i, 0)),
            pl.BlockSpec((1, b), lambda i: (0, 0)),
            pl.BlockSpec((1, b), lambda i: (0, 0)),
            pl.BlockSpec((1, b), lambda i: (0, 0)),
            pl.BlockSpec((c, c), lambda i: (0, 0)),
            pl.BlockSpec((1, c), lambda i: (0, 0)),
            pl.BlockSpec((c, c), lambda i: (0, 0)),
        ],
        out_specs=pl.BlockSpec((b, c), lambda i: (0, 0)),
        scratch_shapes=[pltpu.VMEM((b, c), jnp.float32)],
        compiler_params=pltpu.CompilerParams(
            dimension_semantics=("arbitrary",),
            vmem_limit_bytes=32 * 1024 * 1024),
    )(x_p, starts2d, ends2d, invc2d, w2_t, b2_2d, w1b_fold)

    # --- kernel 2: one matmul + broadcast-add + ReLU per row tile ------------
    y = pl.pallas_call(
        rowwise_kernel,
        out_shape=jax.ShapeDtypeStruct((n_pad, c), jnp.float32),
        grid=grid,
        in_specs=[
            pl.BlockSpec((tm, c), lambda i: (i, 0)),
            pl.BlockSpec((b, c), lambda i: (0, 0)),
            pl.BlockSpec((1, b), lambda i: (0, 0)),
            pl.BlockSpec((1, b), lambda i: (0, 0)),
            pl.BlockSpec((c, c), lambda i: (0, 0)),
            pl.BlockSpec((1, c), lambda i: (0, 0)),
        ],
        out_specs=pl.BlockSpec((tm, c), lambda i: (i, 0)),
        compiler_params=pltpu.CompilerParams(
            dimension_semantics=("parallel",),
            vmem_limit_bytes=32 * 1024 * 1024),
    )(x_p, t, starts2d, ends2d, w1a_fold, b_fold)

    return y[:n]


# ----------------------------------------------------------------------------
# Pure-JAX reference (mirrors the PyTorch forward, eval-mode BN)
# ----------------------------------------------------------------------------
def reference(x, offsets, params):
    w1, b1, w2, b2 = params["w1"], params["b1"], params["w2"], params["b2"]
    gamma, beta = params["gamma"], params["beta"]
    rmean, rvar = params["rmean"], params["rvar"]
    eps = 1e-5
    outs = []
    bnum = offsets.shape[0]
    for i in range(bnum):
        s = 0 if i == 0 else int(offsets[i - 1])
        e = int(offsets[i])
        cnt = e - s
        xb = x[s:e, :]
        pooled = xb.sum(0, keepdims=True) / cnt
        g = jnp.maximum(pooled @ w2.T + b2, 0.0)               # linear2
        xb = jnp.concatenate([xb, jnp.tile(g, (cnt, 1))], axis=1)
        outs.append(xb)
    xcat = jnp.concatenate(outs, axis=0)
    z = xcat @ w1.T + b1                                       # linear1
    z = gamma * (z - rmean) / jnp.sqrt(rvar + eps) + beta      # BN (eval)
    return jnp.maximum(z, 0.0)


if __name__ == "__main__":
    key = jax.random.PRNGKey(0)
    C = 32            # in_planes (out_planes is None branch)
    B = 2             # batches
    N = 256           # total points (128 per batch)

    k = jax.random.split(key, 10)
    x = jax.random.normal(k[0], (N, C), jnp.float32)
    offsets = jnp.array([128, 256], dtype=jnp.int32)

    params = {
        "w1": jax.random.normal(k[1], (C, 2 * C), jnp.float32) * 0.05,
        "b1": jax.random.normal(k[2], (C,), jnp.float32) * 0.05,
        "w2": jax.random.normal(k[3], (C, C), jnp.float32) * 0.05,
        "b2": jax.random.normal(k[4], (C,), jnp.float32) * 0.05,
        "gamma": 1.0 + 0.1 * jax.random.normal(k[5], (C,), jnp.float32),
        "beta": 0.1 * jax.random.normal(k[6], (C,), jnp.float32),
        "rmean": 0.1 * jax.random.normal(k[7], (C,), jnp.float32),
        "rvar": 1.0 + 0.1 * jax.nn.softplus(
            jax.random.normal(k[8], (C,), jnp.float32)),
    }

    y = transition_up(x, offsets, params)
    y = jax.block_until_ready(y)

    y_ref = reference(x, offsets, params)
    assert y.shape == (N, C)
    assert jnp.allclose(y, y_ref, rtol=2e-3, atol=2e-3), (
        float(jnp.max(jnp.abs(y - y_ref))))

    print("KERNEL_OK")
</pallas_src>

<mosaic_0001>
module attributes {stable_mosaic.version = 11 : i64} {
  func.func @seg_pool_linear2_kernel(%arg0: i32, %arg1: memref<1024x32xf32, #tpu.memory_space<vmem>>, %arg2: memref<1x2xi32, #tpu.memory_space<vmem>>, %arg3: memref<1x2xi32, #tpu.memory_space<vmem>>, %arg4: memref<1x2xf32, #tpu.memory_space<vmem>>, %arg5: memref<32x32xf32, #tpu.memory_space<vmem>>, %arg6: memref<1x32xf32, #tpu.memory_space<vmem>>, %arg7: memref<32x32xf32, #tpu.memory_space<vmem>>, %arg8: memref<2x32xf32, #tpu.memory_space<vmem>>, %arg9: memref<2x32xf32, #tpu.memory_space<vmem>>) attributes {dimension_semantics = [#tpu.dimension_semantics<arbitrary>], iteration_bounds = array<i64: 1>, scalar_prefetch = 0 : i64, scratch_operands = 1 : i64, tpu.core_type = #tpu.core_type<tc>, window_params = [{transform_indices = @transform_0, window_bounds = array<i64: 1024, 32>}, {pipeline_mode = #tpu.pipeline_mode<synchronous>, transform_indices = @transform_1, window_bounds = array<i64: 1, 2>}, {pipeline_mode = #tpu.pipeline_mode<synchronous>, transform_indices = @transform_2, window_bounds = array<i64: 1, 2>}, {pipeline_mode = #tpu.pipeline_mode<synchronous>, transform_indices = @transform_3, window_bounds = array<i64: 1, 2>}, {pipeline_mode = #tpu.pipeline_mode<synchronous>, transform_indices = @transform_4, window_bounds = array<i64: 32, 32>}, {pipeline_mode = #tpu.pipeline_mode<synchronous>, transform_indices = @transform_5, window_bounds = array<i64: 1, 32>}, {pipeline_mode = #tpu.pipeline_mode<synchronous>, transform_indices = @transform_6, window_bounds = array<i64: 32, 32>}, {pipeline_mode = #tpu.pipeline_mode<synchronous>, transform_indices = @transform_7, window_bounds = array<i64: 2, 32>}]} {
    %c0_i32 = arith.constant 0 : i32
    %0 = arith.cmpi eq, %arg0, %c0_i32 : i32
    %1 = arith.extui %0 : i1 to i32
    %c0_i32_0 = arith.constant 0 : i32
    %2 = arith.cmpi ne, %1, %c0_i32_0 : i32
    scf.if %2 {
      %cst_15 = arith.constant 0.000000e+00 : f32
      %27 = vector.broadcast %cst_15 : f32 to vector<2x32xf32>
      %c0_16 = arith.constant 0 : index
      %c0_17 = arith.constant 0 : index
      %28 = vector.load %arg9[%c0_16, %c0_17] : memref<2x32xf32, #tpu.memory_space<vmem>>, vector<2x32xf32>
      tpu.vector_store %arg9[%c0_16, %c0_17], %27 {strides = array<i32>} : memref<2x32xf32, #tpu.memory_space<vmem>>, vector<2x32xf32>,
    } else {
    }
    %c1024_i32 = arith.constant 1024 : i32
    %3 = arith.muli %arg0, %c1024_i32 : i32
    %4 = tpu.iota {dimensions = array<i32: 0>} : vector<1024x2xi32>
    %5 = vector.broadcast %3 : i32 to vector<1024x2xi32>
    %6 = arith.addi %5, %4 : vector<1024x2xi32>
    %c0 = arith.constant 0 : index
    %c0_1 = arith.constant 0 : index
    %7 = vector.load %arg2[%c0, %c0_1] : memref<1x2xi32, #tpu.memory_space<vmem>>, vector<1x2xi32>
    %8 = vector.broadcast %7 : vector<1x2xi32> to vector<1024x2xi32>
    %9 = arith.cmpi sge, %6, %8 : vector<1024x2xi32>
    %c0_2 = arith.constant 0 : index
    %c0_3 = arith.constant 0 : index
    %10 = vector.load %arg3[%c0_2, %c0_3] : memref<1x2xi32, #tpu.memory_space<vmem>>, vector<1x2xi32>
    %11 = vector.broadcast %10 : vector<1x2xi32> to vector<1024x2xi32>
    %12 = arith.cmpi slt, %6, %11 : vector<1024x2xi32>
    %13 = arith.andi %9, %12 : vector<1024x2xi1>
    %c0_4 = arith.constant 0 : index
    %c0_5 = arith.constant 0 : index
    %14 = vector.load %arg4[%c0_4, %c0_5] : memref<1x2xf32, #tpu.memory_space<vmem>>, vector<1x2xf32>
    %cst = arith.constant 0.000000e+00 : f32
    %15 = vector.shape_cast %14 : vector<1x2xf32> to vector<1x2xf32>
    %16 = vector.broadcast %15 : vector<1x2xf32> to vector<1024x2xf32>
    %17 = vector.broadcast %cst : f32 to vector<1024x2xf32>
    %18 = arith.select %13, %16, %17 : vector<1024x2xi1>, vector<1024x2xf32>
    %c0_6 = arith.constant 0 : index
    %c0_7 = arith.constant 0 : index
    %19 = vector.load %arg9[%c0_6, %c0_7] : memref<2x32xf32, #tpu.memory_space<vmem>>, vector<2x32xf32>
    %c0_8 = arith.constant 0 : index
    %c0_9 = arith.constant 0 : index
    %20 = vector.load %arg1[%c0_8, %c0_9] : memref<1024x32xf32, #tpu.memory_space<vmem>>, vector<1024x32xf32>
    %cst_10 = arith.constant dense<0.000000e+00> : vector<2x32xf32>
    %21 = tpu.matmul %18, %20, %cst_10 {dimension_numbers = #tpu.dot_dimension_numbers<[0], [0], [1], [1], [0, 1, 1, 1], [], []>} : vector<1024x2xf32>, vector<1024x32xf32>, vector<2x32xf32> -> vector<2x32xf32>
    %22 = arith.addf %19, %21 : vector<2x32xf32>
    %c0_11 = arith.constant 0 : index
    %c0_12 = arith.constant 0 : index
    %23 = vector.load %arg9[%c0_11, %c0_12] : memref<2x32xf32, #tpu.memory_space<vmem>>, vector<2x32xf32>
    tpu.vector_store %arg9[%c0_11, %c0_12], %22 {strides = array<i32>} : memref<2x32xf32, #tpu.memory_space<vmem>>, vector<2x32xf32>,
    %c0_i32_13 = arith.constant 0 : i32
    %24 = arith.cmpi eq, %arg0, %c0_i32_13 : i32
    %25 = arith.extui %24 : i1 to i32
    %c0_i32_14 = arith.constant 0 : i32
    %26 = arith.cmpi ne, %25, %c0_i32_14 : i32
    scf.if %26 {
      %c0_15 = arith.constant 0 : index
      %c0_16 = arith.constant 0 : index
      %27 = vector.load %arg9[%c0_15, %c0_16] : memref<2x32xf32, #tpu.memory_space<vmem>>, vector<2x32xf32>
      %c0_17 = arith.constant 0 : index
      %c0_18 = arith.constant 0 : index
      %28 = vector.load %arg5[%c0_17, %c0_18] : memref<32x32xf32, #tpu.memory_space<vmem>>, vector<32x32xf32>
      %cst_19 = arith.constant dense<0.000000e+00> : vector<2x32xf32>
      %29 = tpu.matmul %27, %28, %cst_19 {dimension_numbers = #tpu.dot_dimension_numbers<[1], [0], [0], [1], [0, 0, 1, 1], [], []>} : vector<2x32xf32>, vector<32x32xf32>, vector<2x32xf32> -> vector<2x32xf32>
      %c0_20 = arith.constant 0 : index
      %c0_21 = arith.constant 0 : index
      %30 = vector.load %arg6[%c0_20, %c0_21] : memref<1x32xf32, #tpu.memory_space<vmem>>, vector<1x32xf32>
      %31 = vector.broadcast %30 : vector<1x32xf32> to vector<2x32xf32>
      %32 = arith.addf %29, %31 : vector<2x32xf32>
      %cst_22 = arith.constant 0.000000e+00 : f32
      %33 = vector.broadcast %cst_22 : f32 to vector<2x32xf32>
      %34 = arith.maximumf %32, %33 : vector<2x32xf32>
      %c0_23 = arith.constant 0 : index
      %c0_24 = arith.constant 0 : index
      %35 = vector.load %arg7[%c0_23, %c0_24] : memref<32x32xf32, #tpu.memory_space<vmem>>, vector<32x32xf32>
      %cst_25 = arith.constant dense<0.000000e+00> : vector<2x32xf32>
      %36 = tpu.matmul %34, %35, %cst_25 {dimension_numbers = #tpu.dot_dimension_numbers<[1], [0], [0], [1], [0, 0, 1, 1], [], []>} : vector<2x32xf32>, vector<32x32xf32>, vector<2x32xf32> -> vector<2x32xf32>
      %c0_26 = arith.constant 0 : index
      %c0_27 = arith.constant 0 : index
      %37 = vector.load %arg8[%c0_26, %c0_27] : memref<2x32xf32, #tpu.memory_space<vmem>>, vector<2x32xf32>
      tpu.vector_store %arg8[%c0_26, %c0_27], %36 {strides = array<i32>} : memref<2x32xf32, #tpu.memory_space<vmem>>, vector<2x32xf32>,
    } else {
    }
    return
  }
  func.func @transform_0(%arg0: i32) -> (i32, i32) {
    %c0_i32 = arith.constant 0 : i32
    %c0_i32_0 = arith.constant 0 : i32
    return %arg0, %c0_i32 : i32, i32
  }
  func.func @transform_1(%arg0: i32) -> (i32, i32) {
    %c0_i32 = arith.constant 0 : i32
    %c0_i32_0 = arith.constant 0 : i32
    %c0_i32_1 = arith.constant 0 : i32
    return %c0_i32, %c0_i32_0 : i32, i32
  }
  func.func @transform_2(%arg0: i32) -> (i32, i32) {
    %c0_i32 = arith.constant 0 : i32
    %c0_i32_0 = arith.constant 0 : i32
    %c0_i32_1 = arith.constant 0 : i32
    return %c0_i32, %c0_i32_0 : i32, i32
  }
  func.func @transform_3(%arg0: i32) -> (i32, i32) {
    %c0_i32 = arith.constant 0 : i32
    %c0_i32_0 = arith.constant 0 : i32
    %c0_i32_1 = arith.constant 0 : i32
    return %c0_i32, %c0_i32_0 : i32, i32
  }
  func.func @transform_4(%arg0: i32) -> (i32, i32) {
    %c0_i32 = arith.constant 0 : i32
    %c0_i32_0 = arith.constant 0 : i32
    %c0_i32_1 = arith.constant 0 : i32
    return %c0_i32, %c0_i32_0 : i32, i32
  }
  func.func @transform_5(%arg0: i32) -> (i32, i32) {
    %c0_i32 = arith.constant 0 : i32
    %c0_i32_0 = arith.constant 0 : i32
    %c0_i32_1 = arith.constant 0 : i32
    return %c0_i32, %c0_i32_0 : i32, i32
  }
  func.func @transform_6(%arg0: i32) -> (i32, i32) {
    %c0_i32 = arith.constant 0 : i32
    %c0_i32_0 = arith.constant 0 : i32
    %c0_i32_1 = arith.constant 0 : i32
    return %c0_i32, %c0_i32_0 : i32, i32
  }
  func.func @transform_7(%arg0: i32) -> (i32, i32) {
    %c0_i32 = arith.constant 0 : i32
    %c0_i32_0 = arith.constant 0 : i32
    %c0_i32_1 = arith.constant 0 : i32
    return %c0_i32, %c0_i32_0 : i32, i32
  }
}

</mosaic_0001>

<llo_original>
// kernel: tpu_custom_call.1
$region0: #{tpu_custom_call.1}
  #allocation0 [shape = 'u32[]', space=smem, size = 0x4, offset = 0x4, fixed_abs, tag = 'smem constant byte address 0x4 - core index']
  #allocation1 [shape = 'u32[144,128]{1,0:T(1,128)}', space=vmem, size = 0x12000, scoped, tag = 'internal scratch']
  #allocation2 [shape = 'f32[2,32]{1,0:T(2,128)}', space=vmem, size = 0x400, scoped, tag = 'scratch operand']
  %s0 = inlined_call_operand.vmem [shape: f32[1024,32], index: 0, kind: input, shape index: {}]
  %s1 = inlined_call_operand.vmem [shape: s32[1,2], index: 1, kind: input, shape index: {}]
  %s2 = inlined_call_operand.vmem [shape: s32[1,2], index: 2, kind: input, shape index: {}]
  %s3 = inlined_call_operand.vmem [shape: f32[1,2], index: 3, kind: input, shape index: {}]
  %s4 = inlined_call_operand.vmem [shape: f32[32,32], index: 4, kind: input, shape index: {}]
  %s5 = inlined_call_operand.vmem [shape: f32[1,32], index: 5, kind: input, shape index: {}]
  %s6 = inlined_call_operand.vmem [shape: f32[32,32], index: 6, kind: input, shape index: {}]
  %s7 = inlined_call_operand.hbm [shape: f32[2,32], index: 7, kind: output, shape index: {}]
  %s8 = sld [smem:[#allocation0]]
  $region46: #{tpu_custom_call.1} parent=0
    _
  %s10 = ssub.s32 1, %s8
  %s11 = scalar_select 0, %s10, %s8
  $region1: #{tpu_custom_call.1} parent=0
    #allocation3 [shape = 'u8[1024]{0}', space=vmem, size = 0x400, scoped, tag = 'output window, operand 0, single buffered']
    #allocation4 [shape = 's32[1]{0}', space=sflag, size = 0x4, scoped, tag = 'scoped memory for tpu_custom_call.1']
    %12 = vsyncpa [#allocation4], 0
    // Predicated region
    $region2: #{tpu_custom_call.1} parent=1 // pred_check
      _
    $region3: #{tpu_custom_call.1} parent=1 // pred_check_branch
      %14 = sbr.rel (0) target = $region5
    $region4: #{tpu_custom_call.1} parent=1 // pred_region
      _
    $region5: #{tpu_custom_call.1} parent=1 // pred_fallthru
      _
    // Predicated region
    $region6: #{tpu_custom_call.1} parent=1 // pred_check
      _
    $region7: #{tpu_custom_call.1} parent=1 // pred_check_branch
      %16 = sbr.rel (0) target = $region9
    $region8: #{tpu_custom_call.1} parent=1 // pred_region
      _
    $region9: #{tpu_custom_call.1} parent=1 // pred_fallthru
      _
    // Predicated region
    $region10: #{tpu_custom_call.1} parent=1 // pred_check
      _
    $region11: #{tpu_custom_call.1} parent=1 // pred_check_branch
      %18 = sbr.rel (0) target = $region13
    $region12: #{tpu_custom_call.1} parent=1 // pred_region
      _
    $region13: #{tpu_custom_call.1} parent=1 // pred_fallthru
      _
    // Predicated region
    $region14: #{tpu_custom_call.1} parent=1 // pred_check
      _
    $region15: #{tpu_custom_call.1} parent=1 // pred_check_branch
      %20 = sbr.rel (0) target = $region17
    $region16: #{tpu_custom_call.1} parent=1 // pred_region
      _
    $region17: #{tpu_custom_call.1} parent=1 // pred_fallthru
      _
    // Predicated region
    $region18: #{tpu_custom_call.1} parent=1 // pred_check
      _
    $region19: #{tpu_custom_call.1} parent=1 // pred_check_branch
      %22 = sbr.rel (0) target = $region21
    $region20: #{tpu_custom_call.1} parent=1 // pred_region
      _
    $region21: #{tpu_custom_call.1} parent=1 // pred_fallthru
      _
    // Predicated region
    $region22: #{tpu_custom_call.1} parent=1 // pred_check
      _
    $region23: #{tpu_custom_call.1} parent=1 // pred_check_branch
      %24 = sbr.rel (0) target = $region25
    $region24: #{tpu_custom_call.1} parent=1 // pred_region
      _
    $region25: #{tpu_custom_call.1} parent=1 // pred_fallthru
      _
    // Predicated region
    $region26: #{tpu_custom_call.1} parent=1 // pred_check
      _
    $region27: #{tpu_custom_call.1} parent=1 // pred_check_branch
      %26 = sbr.rel (0) target = $region29
    $region28: #{tpu_custom_call.1} parent=1 // pred_region
      _
    $region29: #{tpu_custom_call.1} parent=1 // pred_fallthru
      _
    %p27 = scmp.eq.s32.totalorder 0, 0
    // Predicated region
    $region30: #{tpu_custom_call.1} parent=1 // pred_check
      %p28 = pneg %p27
    $region31: #{tpu_custom_call.1} parent=1 // pred_check_branch
      %30 = sbr.rel (%p28) target = $region33
    $region32: #{tpu_custom_call.1} parent=1 // pred_region
      %vm31 = vcmask 254976
      %32 = vst.msk [vmem:[#allocation2] sm:$0x3] %vm31, 0.0
    $region33: #{tpu_custom_call.1} parent=1 // pred_fallthru
      _
    %s33 = smul.u32 0, 1024
    %v34 = vlaneseq
    %v35 = vshrl.u32 %v34, 7
    %v36 = vadd.s32 %v35, 8
    %v37 = vadd.s32 %v35, 16
    %v38 = vadd.s32 %v35, 24
    %v39 = vadd.s32 %v35, 32
    %v40 = vadd.s32 %v35, 40
    %v41 = vadd.s32 %v35, 48
    %v42 = vadd.s32 %v35, 56
    %v43 = vadd.s32 %v35, 64
    %v44 = vadd.s32 %v35, 72
    %v45 = vadd.s32 %v35, 80
    %v46 = vadd.s32 %v35, 88
    %v47 = vadd.s32 %v35, 96
    %v48 = vadd.s32 %v35, 104
    %v49 = vadd.s32 %v35, 112
    %v50 = vadd.s32 %v35, 120
    %v51 = vadd.s32 %v35, 128
    %v52 = vadd.s32 %v35, 136
    %v53 = vadd.s32 %v35, 144
    %v54 = vadd.s32 %v35, 152
    %v55 = vadd.s32 %v35, 160
    %v56 = vadd.s32 %v35, 168
    %v57 = vadd.s32 %v35, 176
    %v58 = vadd.s32 %v35, 184
    %v59 = vadd.s32 %v35, 192
    %v60 = vadd.s32 %v35, 200
    %v61 = vadd.s32 %v35, 208
    %v62 = vadd.s32 %v35, 216
    %v63 = vadd.s32 %v35, 224
    %v64 = vadd.s32 %v35, 232
    %v65 = vadd.s32 %v35, 240
    %v66 = vadd.s32 %v35, 248
    %v67 = vadd.s32 %v35, 256
    %v68 = vadd.s32 %v35, 264
    %v69 = vadd.s32 %v35, 272
    %v70 = vadd.s32 %v35, 280
    %v71 = vadd.s32 %v35, 288
    %v72 = vadd.s32 %v35, 296
    %v73 = vadd.s32 %v35, 304
    %v74 = vadd.s32 %v35, 312
    %v75 = vadd.s32 %v35, 320
    %v76 = vadd.s32 %v35, 328
    %v77 = vadd.s32 %v35, 336
    %v78 = vadd.s32 %v35, 344
    %v79 = vadd.s32 %v35, 352
    %v80 = vadd.s32 %v35, 360
    %v81 = vadd.s32 %v35, 368
    %v82 = vadd.s32 %v35, 376
    %v83 = vadd.s32 %v35, 384
    %v84 = vadd.s32 %v35, 392
    %v85 = vadd.s32 %v35, 400
    %v86 = vadd.s32 %v35, 408
    %v87 = vadd.s32 %v35, 416
    %v88 = vadd.s32 %v35, 424
    %v89 = vadd.s32 %v35, 432
    %v90 = vadd.s32 %v35, 440
    %v91 = vadd.s32 %v35, 448
    %v92 = vadd.s32 %v35, 456
    %v93 = vadd.s32 %v35, 464
    %v94 = vadd.s32 %v35, 472
    %v95 = vadd.s32 %v35, 480
    %v96 = vadd.s32 %v35, 488
    %v97 = vadd.s32 %v35, 496
    %v98 = vadd.s32 %v35, 504
    %v99 = vadd.s32 %v35, 512
    %v100 = vadd.s32 %v35, 520
    %v101 = vadd.s32 %v35, 528
    %v102 = vadd.s32 %v35, 536
    %v103 = vadd.s32 %v35, 544
    %v104 = vadd.s32 %v35, 552
    %v105 = vadd.s32 %v35, 560
    %v106 = vadd.s32 %v35, 568
    %v107 = vadd.s32 %v35, 576
    %v108 = vadd.s32 %v35, 584
    %v109 = vadd.s32 %v35, 592
    %v110 = vadd.s32 %v35, 600
    %v111 = vadd.s32 %v35, 608
    %v112 = vadd.s32 %v35, 616
    %v113 = vadd.s32 %v35, 624
    %v114 = vadd.s32 %v35, 632
    %v115 = vadd.s32 %v35, 640
    %v116 = vadd.s32 %v35, 648
    %v117 = vadd.s32 %v35, 656
    %v118 = vadd.s32 %v35, 664
    %v119 = vadd.s32 %v35, 672
    %v120 = vadd.s32 %v35, 680
    %v121 = vadd.s32 %v35, 688
    %v122 = vadd.s32 %v35, 696
    %v123 = vadd.s32 %v35, 704
    %v124 = vadd.s32 %v35, 712
    %v125 = vadd.s32 %v35, 720
    %v126 = vadd.s32 %v35, 728
    %v127 = vadd.s32 %v35, 736
    %v128 = vadd.s32 %v35, 744
    %v129 = vadd.s32 %v35, 752
    %v130 = vadd.s32 %v35, 760
    %v131 = vadd.s32 %v35, 768
    %v132 = vadd.s32 %v35, 776
    %v133 = vadd.s32 %v35, 784
    %v134 = vadd.s32 %v35, 792
    %v135 = vadd.s32 %v35, 800
    %v136 = vadd.s32 %v35, 808
    %v137 = vadd.s32 %v35, 816
    %v138 = vadd.s32 %v35, 824
    %v139 = vadd.s32 %v35, 832
    %v140 = vadd.s32 %v35, 840
    %v141 = vadd.s32 %v35, 848
    %v142 = vadd.s32 %v35, 856
    %v143 = vadd.s32 %v35, 864
    %v144 = vadd.s32 %v35, 872
    %v145 = vadd.s32 %v35, 880
    %v146 = vadd.s32 %v35, 888
    %v147 = vadd.s32 %v35, 896
    %v148 = vadd.s32 %v35, 904
    %v149 = vadd.s32 %v35, 912
    %v150 = vadd.s32 %v35, 920
    %v151 = vadd.s32 %v35, 928
    %v152 = vadd.s32 %v35, 936
    %v153 = vadd.s32 %v35, 944
    %v154 = vadd.s32 %v35, 952
    %v155 = vadd.s32 %v35, 960
    %v156 = vadd.s32 %v35, 968
    %v157 = vadd.s32 %v35, 976
    %v158 = vadd.s32 %v35, 984
    %v159 = vadd.s32 %v35, 992
    %v160 = vadd.s32 %v35, 1000
    %v161 = vadd.s32 %v35, 1008
    %v162 = vadd.s32 %v35, 1016
    %v163 = vstv %s33
    %v164 = vadd.s32 %v163, %v35
    %v165 = vadd.s32 %v163, %v36
    %v166 = vadd.s32 %v163, %v37
    %v167 = vadd.s32 %v163, %v38
    %v168 = vadd.s32 %v163, %v39
    %v169 = vadd.s32 %v163, %v40
    %v170 = vadd.s32 %v163, %v41
    %v171 = vadd.s32 %v163, %v42
    %v172 = vadd.s32 %v163, %v43
    %v173 = vadd.s32 %v163, %v44
    %v174 = vadd.s32 %v163, %v45
    %v175 = vadd.s32 %v163, %v46
    %v176 = vadd.s32 %v163, %v47
    %v177 = vadd.s32 %v163, %v48
    %v178 = vadd.s32 %v163, %v49
    %v179 = vadd.s32 %v163, %v50
    %v180 = vadd.s32 %v163, %v51
    %v181 = vadd.s32 %v163, %v52
    %v182 = vadd.s32 %v163, %v53
    %v183 = vadd.s32 %v163, %v54
    %v184 = vadd.s32 %v163, %v55
    %v185 = vadd.s32 %v163, %v56
    %v186 = vadd.s32 %v163, %v57
    %v187 = vadd.s32 %v163, %v58
    %v188 = vadd.s32 %v163, %v59
    %v189 = vadd.s32 %v163, %v60
    %v190 = vadd.s32 %v163, %v61
    %v191 = vadd.s32 %v163, %v62
    %v192 = vadd.s32 %v163, %v63
    %v193 = vadd.s32 %v163, %v64
    %v194 = vadd.s32 %v163, %v65
    %v195 = vadd.s32 %v163, %v66
    %v196 = vadd.s32 %v163, %v67
    %v197 = vadd.s32 %v163, %v68
    %v198 = vadd.s32 %v163, %v69
    %v199 = vadd.s32 %v163, %v70
    %v200 = vadd.s32 %v163, %v71
    %v201 = vadd.s32 %v163, %v72
    %v202 = vadd.s32 %v163, %v73
    %v203 = vadd.s32 %v163, %v74
    %v204 = vadd.s32 %v163, %v75
    %v205 = vadd.s32 %v163, %v76
    %v206 = vadd.s32 %v163, %v77
    %v207 = vadd.s32 %v163, %v78
    %v208 = vadd.s32 %v163, %v79
    %v209 = vadd.s32 %v163, %v80
    %v210 = vadd.s32 %v163, %v81
    %v211 = vadd.s32 %v163, %v82
    %v212 = vadd.s32 %v163, %v83
    %v213 = vadd.s32 %v163, %v84
    %v214 = vadd.s32 %v163, %v85
    %v215 = vadd.s32 %v163, %v86
    %v216 = vadd.s32 %v163, %v87
    %v217 = vadd.s32 %v163, %v88
    %v218 = vadd.s32 %v163, %v89
    %v219 = vadd.s32 %v163, %v90
    %v220 = vadd.s32 %v163, %v91
    %v221 = vadd.s32 %v163, %v92
    %v222 = vadd.s32 %v163, %v93
    %v223 = vadd.s32 %v163, %v94
    %v224 = vadd.s32 %v163, %v95
    %v225 = vadd.s32 %v163, %v96
    %v226 = vadd.s32 %v163, %v97
    %v227 = vadd.s32 %v163, %v98
    %v228 = vadd.s32 %v163, %v99
    %v229 = vadd.s32 %v163, %v100
    %v230 = vadd.s32 %v163, %v101
    %v231 = vadd.s32 %v163, %v102
    %v232 = vadd.s32 %v163, %v103
    %v233 = vadd.s32 %v163, %v104
    %v234 = vadd.s32 %v163, %v105
    %v235 = vadd.s32 %v163, %v106
    %v236 = vadd.s32 %v163, %v107
    %v237 = vadd.s32 %v163, %v108
    %v238 = vadd.s32 %v163, %v109
    %v239 = vadd.s32 %v163, %v110
    %v240 = vadd.s32 %v163, %v111
    %v241 = vadd.s32 %v163, %v112
    %v242 = vadd.s32 %v163, %v113
    %v243 = vadd.s32 %v163, %v114
    %v244 = vadd.s32 %v163, %v115
    %v245 = vadd.s32 %v163, %v116
    %v246 = vadd.s32 %v163, %v117
    %v247 = vadd.s32 %v163, %v118
    %v248 = vadd.s32 %v163, %v119
    %v249 = vadd.s32 %v163, %v120
    %v250 = vadd.s32 %v163, %v121
    %v251 = vadd.s32 %v163, %v122
    %v252 = vadd.s32 %v163, %v123
    %v253 = vadd.s32 %v163, %v124
    %v254 = vadd.s32 %v163, %v125
    %v255 = vadd.s32 %v163, %v126
    %v256 = vadd.s32 %v163, %v127
    %v257 = vadd.s32 %v163, %v128
    %v258 = vadd.s32 %v163, %v129
    %v259 = vadd.s32 %v163, %v130
    %v260 = vadd.s32 %v163, %v131
    %v261 = vadd.s32 %v163, %v132
    %v262 = vadd.s32 %v163, %v133
    %v263 = vadd.s32 %v163, %v134
    %v264 = vadd.s32 %v163, %v135
    %v265 = vadd.s32 %v163, %v136
    %v266 = vadd.s32 %v163, %v137
    %v267 = vadd.s32 %v163, %v138
    %v268 = vadd.s32 %v163, %v139
    %v269 = vadd.s32 %v163, %v140
    %v270 = vadd.s32 %v163, %v141
    %v271 = vadd.s32 %v163, %v142
    %v272 = vadd.s32 %v163, %v143
    %v273 = vadd.s32 %v163, %v144
    %v274 = vadd.s32 %v163, %v145
    %v275 = vadd.s32 %v163, %v146
    %v276 = vadd.s32 %v163, %v147
    %v277 = vadd.s32 %v163, %v148
    %v278 = vadd.s32 %v163, %v149
    %v279 = vadd.s32 %v163, %v150
    %v280 = vadd.s32 %v163, %v151
    %v281 = vadd.s32 %v163, %v152
    %v282 = vadd.s32 %v163, %v153
    %v283 = vadd.s32 %v163, %v154
    %v284 = vadd.s32 %v163, %v155
    %v285 = vadd.s32 %v163, %v156
    %v286 = vadd.s32 %v163, %v157
    %v287 = vadd.s32 %v163, %v158
    %v288 = vadd.s32 %v163, %v159
    %v289 = vadd.s32 %v163, %v160
    %v290 = vadd.s32 %v163, %v161
    %v291 = vadd.s32 %v163, %v162
    %v292 = vld [vmem:[%s1] sm:$0x1]
    %v293 = vlaneseq
    %v294 = vshrl.u32 %v293, 7
    %v295 = vsub.s32 0, %v294
    %v296 = vrot.slane %v292, %v295
    %vm297 = vcmp.ge.s32.totalorder %v164, %v296
    %vm298 = vcmp.ge.s32.totalorder %v165, %v296
    %vm299 = vcmp.ge.s32.totalorder %v166, %v296
    %vm300 = vcmp.ge.s32.totalorder %v167, %v296
    %vm301 = vcmp.ge.s32.totalorder %v168, %v296
    %vm302 = vcmp.ge.s32.totalorder %v169, %v296
    %vm303 = vcmp.ge.s32.totalorder %v170, %v296
    %vm304 = vcmp.ge.s32.totalorder %v171, %v296
    %vm305 = vcmp.ge.s32.totalorder %v172, %v296
    %vm306 = vcmp.ge.s32.totalorder %v173, %v296
    %vm307 = vcmp.ge.s32.totalorder %v174, %v296
    %vm308 = vcmp.ge.s32.totalorder %v175, %v296
    %vm309 = vcmp.ge.s32.totalorder %v176, %v296
    %vm310 = vcmp.ge.s32.totalorder %v177, %v296
    %vm311 = vcmp.ge.s32.totalorder %v178, %v296
    %vm312 = vcmp.ge.s32.totalorder %v179, %v296
    %vm313 = vcmp.ge.s32.totalorder %v180, %v296
    %vm314 = vcmp.ge.s32.totalorder %v181, %v296
    %vm315 = vcmp.ge.s32.totalorder %v182, %v296
    %vm316 = vcmp.ge.s32.totalorder %v183, %v296
    %vm317 = vcmp.ge.s32.totalorder %v184, %v296
    %vm318 = vcmp.ge.s32.totalorder %v185, %v296
    %vm319 = vcmp.ge.s32.totalorder %v186, %v296
    %vm320 = vcmp.ge.s32.totalorder %v187, %v296
    %vm321 = vcmp.ge.s32.totalorder %v188, %v296
    %vm322 = vcmp.ge.s32.totalorder %v189, %v296
    %vm323 = vcmp.ge.s32.totalorder %v190, %v296
    %vm324 = vcmp.ge.s32.totalorder %v191, %v296
    %vm325 = vcmp.ge.s32.totalorder %v192, %v296
    %vm326 = vcmp.ge.s32.totalorder %v193, %v296
    %vm327 = vcmp.ge.s32.totalorder %v194, %v296
    %vm328 = vcmp.ge.s32.totalorder %v195, %v296
    %vm329 = vcmp.ge.s32.totalorder %v196, %v296
    %vm330 = vcmp.ge.s32.totalorder %v197, %v296
    %vm331 = vcmp.ge.s32.totalorder %v198, %v296
    %vm332 = vcmp.ge.s32.totalorder %v199, %v296
    %vm333 = vcmp.ge.s32.totalorder %v200, %v296
    %vm334 = vcmp.ge.s32.totalorder %v201, %v296
    %vm335 = vcmp.ge.s32.totalorder %v202, %v296
    %vm336 = vcmp.ge.s32.totalorder %v203, %v296
    %vm337 = vcmp.ge.s32.totalorder %v204, %v296
    %vm338 = vcmp.ge.s32.totalorder %v205, %v296
    %vm339 = vcmp.ge.s32.totalorder %v206, %v296
    %vm340 = vcmp.ge.s32.totalorder %v207, %v296
    %vm341 = vcmp.ge.s32.totalorder %v208, %v296
    %vm342 = vcmp.ge.s32.totalorder %v209, %v296
    %vm343 = vcmp.ge.s32.totalorder %v210, %v296
    %vm344 = vcmp.ge.s32.totalorder %v211, %v296
    %vm345 = vcmp.ge.s32.totalorder %v212, %v296
    %vm346 = vcmp.ge.s32.totalorder %v213, %v296
    %vm347 = vcmp.ge.s32.totalorder %v214, %v296
    %vm348 = vcmp.ge.s32.totalorder %v215, %v296
    %vm349 = vcmp.ge.s32.totalorder %v216, %v296
    %vm350 = vcmp.ge.s32.totalorder %v217, %v296
    %vm351 = vcmp.ge.s32.totalorder %v218, %v296
    %vm352 = vcmp.ge.s32.totalorder %v219, %v296
    %vm353 = vcmp.ge.s32.totalorder %v220, %v296
    %vm354 = vcmp.ge.s32.totalorder %v221, %v296
    %vm355 = vcmp.ge.s32.totalorder %v222, %v296
    %vm356 = vcmp.ge.s32.totalorder %v223, %v296
    %vm357 = vcmp.ge.s32.totalorder %v224, %v296
    %vm358 = vcmp.ge.s32.totalorder %v225, %v296
    %vm359 = vcmp.ge.s32.totalorder %v226, %v296
    %vm360 = vcmp.ge.s32.totalorder %v227, %v296
    %vm361 = vcmp.ge.s32.totalorder %v228, %v296
    %vm362 = vcmp.ge.s32.totalorder %v229, %v296
    %vm363 = vcmp.ge.s32.totalorder %v230, %v296
    %vm364 = vcmp.ge.s32.totalorder %v231, %v296
    %vm365 = vcmp.ge.s32.totalorder %v232, %v296
    %vm366 = vcmp.ge.s32.totalorder %v233, %v296
    %vm367 = vcmp.ge.s32.totalorder %v234, %v296
    %vm368 = vcmp.ge.s32.totalorder %v235, %v296
    %vm369 = vcmp.ge.s32.totalorder %v236, %v296
    %vm370 = vcmp.ge.s32.totalorder %v237, %v296
    %vm371 = vcmp.ge.s32.totalorder %v238, %v296
    %vm372 = vcmp.ge.s32.totalorder %v239, %v296
    %vm373 = vcmp.ge.s32.totalorder %v240, %v296
    %vm374 = vcmp.ge.s32.totalorder %v241, %v296
    %vm375 = vcmp.ge.s32.totalorder %v242, %v296
    %vm376 = vcmp.ge.s32.totalorder %v243, %v296
    %vm377 = vcmp.ge.s32.totalorder %v244, %v296
    %vm378 = vcmp.ge.s32.totalorder %v245, %v296
    %vm379 = vcmp.ge.s32.totalorder %v246, %v296
    %vm380 = vcmp.ge.s32.totalorder %v247, %v296
    %vm381 = vcmp.ge.s32.totalorder %v248, %v296
    %vm382 = vcmp.ge.s32.totalorder %v249, %v296
    %vm383 = vcmp.ge.s32.totalorder %v250, %v296
    %vm384 = vcmp.ge.s32.totalorder %v251, %v296
    %vm385 = vcmp.ge.s32.totalorder %v252, %v296
    %vm386 = vcmp.ge.s32.totalorder %v253, %v296
    %vm387 = vcmp.ge.s32.totalorder %v254, %v296
    %vm388 = vcmp.ge.s32.totalorder %v255, %v296
    %vm389 = vcmp.ge.s32.totalorder %v256, %v296
    %vm390 = vcmp.ge.s32.totalorder %v257, %v296
    %vm391 = vcmp.ge.s32.totalorder %v258, %v296
    %vm392 = vcmp.ge.s32.totalorder %v259, %v296
    %vm393 = vcmp.ge.s32.totalorder %v260, %v296
    %vm394 = vcmp.ge.s32.totalorder %v261, %v296
    %vm395 = vcmp.ge.s32.totalorder %v262, %v296
    %vm396 = vcmp.ge.s32.totalorder %v263, %v296
    %vm397 = vcmp.ge.s32.totalorder %v264, %v296
    %vm398 = vcmp.ge.s32.totalorder %v265, %v296
    %vm399 = vcmp.ge.s32.totalorder %v266, %v296
    %vm400 = vcmp.ge.s32.totalorder %v267, %v296
    %vm401 = vcmp.ge.s32.totalorder %v268, %v296
    %vm402 = vcmp.ge.s32.totalorder %v269, %v296
    %vm403 = vcmp.ge.s32.totalorder %v270, %v296
    %vm404 = vcmp.ge.s32.totalorder %v271, %v296
    %vm405 = vcmp.ge.s32.totalorder %v272, %v296
    %vm406 = vcmp.ge.s32.totalorder %v273, %v296
    %vm407 = vcmp.ge.s32.totalorder %v274, %v296
    %vm408 = vcmp.ge.s32.totalorder %v275, %v296
    %vm409 = vcmp.ge.s32.totalorder %v276, %v296
    %vm410 = vcmp.ge.s32.totalorder %v277, %v296
    %vm411 = vcmp.ge.s32.totalorder %v278, %v296
    %vm412 = vcmp.ge.s32.totalorder %v279, %v296
    %vm413 = vcmp.ge.s32.totalorder %v280, %v296
    %vm414 = vcmp.ge.s32.totalorder %v281, %v296
    %vm415 = vcmp.ge.s32.totalorder %v282, %v296
    %vm416 = vcmp.ge.s32.totalorder %v283, %v296
    %vm417 = vcmp.ge.s32.totalorder %v284, %v296
    %vm418 = vcmp.ge.s32.totalorder %v285, %v296
    %vm419 = vcmp.ge.s32.totalorder %v286, %v296
    %vm420 = vcmp.ge.s32.totalorder %v287, %v296
    %vm421 = vcmp.ge.s32.totalorder %v288, %v296
    %vm422 = vcmp.ge.s32.totalorder %v289, %v296
    %vm423 = vcmp.ge.s32.totalorder %v290, %v296
    %vm424 = vcmp.ge.s32.totalorder %v291, %v296
    %v425 = vld [vmem:[%s2] sm:$0x1]
    %v426 = vlaneseq
    %v427 = vshrl.u32 %v426, 7
    %v428 = vsub.s32 0, %v427
    %v429 = vrot.slane %v425, %v428
    %vm430 = vcmp.lt.s32.totalorder %v164, %v429
    %vm431 = vcmp.lt.s32.totalorder %v165, %v429
    %vm432 = vcmp.lt.s32.totalorder %v166, %v429
    %vm433 = vcmp.lt.s32.totalorder %v167, %v429
    %vm434 = vcmp.lt.s32.totalorder %v168, %v429
    %vm435 = vcmp.lt.s32.totalorder %v169, %v429
    %vm436 = vcmp.lt.s32.totalorder %v170, %v429
    %vm437 = vcmp.lt.s32.totalorder %v171, %v429
    %vm438 = vcmp.lt.s32.totalorder %v172, %v429
    %vm439 = vcmp.lt.s32.totalorder %v173, %v429
    %vm440 = vcmp.lt.s32.totalorder %v174, %v429
    %vm441 = vcmp.lt.s32.totalorder %v175, %v429
    %vm442 = vcmp.lt.s32.totalorder %v176, %v429
    %vm443 = vcmp.lt.s32.totalorder %v177, %v429
    %vm444 = vcmp.lt.s32.totalorder %v178, %v429
    %vm445 = vcmp.lt.s32.totalorder %v179, %v429
    %vm446 = vcmp.lt.s32.totalorder %v180, %v429
    %vm447 = vcmp.lt.s32.totalorder %v181, %v429
    %vm448 = vcmp.lt.s32.totalorder %v182, %v429
    %vm449 = vcmp.lt.s32.totalorder %v183, %v429
    %vm450 = vcmp.lt.s32.totalorder %v184, %v429
    %vm451 = vcmp.lt.s32.totalorder %v185, %v429
    %vm452 = vcmp.lt.s32.totalorder %v186, %v429
    %vm453 = vcmp.lt.s32.totalorder %v187, %v429
    %vm454 = vcmp.lt.s32.totalorder %v188, %v429
    %vm455 = vcmp.lt.s32.totalorder %v189, %v429
    %vm456 = vcmp.lt.s32.totalorder %v190, %v429
    %vm457 = vcmp.lt.s32.totalorder %v191, %v429
    %vm458 = vcmp.lt.s32.totalorder %v192, %v429
    %vm459 = vcmp.lt.s32.totalorder %v193, %v429
    %vm460 = vcmp.lt.s32.totalorder %v194, %v429
    %vm461 = vcmp.lt.s32.totalorder %v195, %v429
    %vm462 = vcmp.lt.s32.totalorder %v196, %v429
    %vm463 = vcmp.lt.s32.totalorder %v197, %v429
    %vm464 = vcmp.lt.s32.totalorder %v198, %v429
    %vm465 = vcmp.lt.s32.totalorder %v199, %v429
    %vm466 = vcmp.lt.s32.totalorder %v200, %v429
    %vm467 = vcmp.lt.s32.totalorder %v201, %v429
    %vm468 = vcmp.lt.s32.totalorder %v202, %v429
    %vm469 = vcmp.lt.s32.totalorder %v203, %v429
    %vm470 = vcmp.lt.s32.totalorder %v204, %v429
    %vm471 = vcmp.lt.s32.totalorder %v205, %v429
    %vm472 = vcmp.lt.s32.totalorder %v206, %v429
    %vm473 = vcmp.lt.s32.totalorder %v207, %v429
    %vm474 = vcmp.lt.s32.totalorder %v208, %v429
    %vm475 = vcmp.lt.s32.totalorder %v209, %v429
    %vm476 = vcmp.lt.s32.totalorder %v210, %v429
    %vm477 = vcmp.lt.s32.totalorder %v211, %v429
    %vm478 = vcmp.lt.s32.totalorder %v212, %v429
    %vm479 = vcmp.lt.s32.totalorder %v213, %v429
    %vm480 = vcmp.lt.s32.totalorder %v214, %v429
    %vm481 = vcmp.lt.s32.totalorder %v215, %v429
    %vm482 = vcmp.lt.s32.totalorder %v216, %v429
    %vm483 = vcmp.lt.s32.totalorder %v217, %v429
    %vm484 = vcmp.lt.s32.totalorder %v218, %v429
    %vm485 = vcmp.lt.s32.totalorder %v219, %v429
    %vm486 = vcmp.lt.s32.totalorder %v220, %v429
    %vm487 = vcmp.lt.s32.totalorder %v221, %v429
    %vm488 = vcmp.lt.s32.totalorder %v222, %v429
    %vm489 = vcmp.lt.s32.totalorder %v223, %v429
    %vm490 = vcmp.lt.s32.totalorder %v224, %v429
    %vm491 = vcmp.lt.s32.totalorder %v225, %v429
    %vm492 = vcmp.lt.s32.totalorder %v226, %v429
    %vm493 = vcmp.lt.s32.totalorder %v227, %v429
    %vm494 = vcmp.lt.s32.totalorder %v228, %v429
    %vm495 = vcmp.lt.s32.totalorder %v229, %v429
    %vm496 = vcmp.lt.s32.totalorder %v230, %v429
    %vm497 = vcmp.lt.s32.totalorder %v231, %v429
    %vm498 = vcmp.lt.s32.totalorder %v232, %v429
    %vm499 = vcmp.lt.s32.totalorder %v233, %v429
    %vm500 = vcmp.lt.s32.totalorder %v234, %v429
    %vm501 = vcmp.lt.s32.totalorder %v235, %v429
    %vm502 = vcmp.lt.s32.totalorder %v236, %v429
    %vm503 = vcmp.lt.s32.totalorder %v237, %v429
    %vm504 = vcmp.lt.s32.totalorder %v238, %v429
    %vm505 = vcmp.lt.s32.totalorder %v239, %v429
    %vm506 = vcmp.lt.s32.totalorder %v240, %v429
    %vm507 = vcmp.lt.s32.totalorder %v241, %v429
    %vm508 = vcmp.lt.s32.totalorder %v242, %v429
    %vm509 = vcmp.lt.s32.totalorder %v243, %v429
    %vm510 = vcmp.lt.s32.totalorder %v244, %v429
    %vm511 = vcmp.lt.s32.totalorder %v245, %v429
    %vm512 = vcmp.lt.s32.totalorder %v246, %v429
    %vm513 = vcmp.lt.s32.totalorder %v247, %v429
    %vm514 = vcmp.lt.s32.totalorder %v248, %v429
    %vm515 = vcmp.lt.s32.totalorder %v249, %v429
    %vm516 = vcmp.lt.s32.totalorder %v250, %v429
    %vm517 = vcmp.lt.s32.totalorder %v251, %v429
    %vm518 = vcmp.lt.s32.totalorder %v252, %v429
    %vm519 = vcmp.lt.s32.totalorder %v253, %v429
    %vm520 = vcmp.lt.s32.totalorder %v254, %v429
    %vm521 = vcmp.lt.s32.totalorder %v255, %v429
    %vm522 = vcmp.lt.s32.totalorder %v256, %v429
    %vm523 = vcmp.lt.s32.totalorder %v257, %v429
    %vm524 = vcmp.lt.s32.totalorder %v258, %v429
    %vm525 = vcmp.lt.s32.totalorder %v259, %v429
    %vm526 = vcmp.lt.s32.totalorder %v260, %v429
    %vm527 = vcmp.lt.s32.totalorder %v261, %v429
    %vm528 = vcmp.lt.s32.totalorder %v262, %v429
    %vm529 = vcmp.lt.s32.totalorder %v263, %v429
    %vm530 = vcmp.lt.s32.totalorder %v264, %v429
    %vm531 = vcmp.lt.s32.totalorder %v265, %v429
    %vm532 = vcmp.lt.s32.totalorder %v266, %v429
    %vm533 = vcmp.lt.s32.totalorder %v267, %v429
    %vm534 = vcmp.lt.s32.totalorder %v268, %v429
    %vm535 = vcmp.lt.s32.totalorder %v269, %v429
    %vm536 = vcmp.lt.s32.totalorder %v270, %v429
    %vm537 = vcmp.lt.s32.totalorder %v271, %v429
    %vm538 = vcmp.lt.s32.totalorder %v272, %v429
    %vm539 = vcmp.lt.s32.totalorder %v273, %v429
    %vm540 = vcmp.lt.s32.totalorder %v274, %v429
    %vm541 = vcmp.lt.s32.totalorder %v275, %v429
    %vm542 = vcmp.lt.s32.totalorder %v276, %v429
    %vm543 = vcmp.lt.s32.totalorder %v277, %v429
    %vm544 = vcmp.lt.s32.totalorder %v278, %v429
    %vm545 = vcmp.lt.s32.totalorder %v279, %v429
    %vm546 = vcmp.lt.s32.totalorder %v280, %v429
    %vm547 = vcmp.lt.s32.totalorder %v281, %v429
    %vm548 = vcmp.lt.s32.totalorder %v282, %v429
    %vm549 = vcmp.lt.s32.totalorder %v283, %v429
    %vm550 = vcmp.lt.s32.totalorder %v284, %v429
    %vm551 = vcmp.lt.s32.totalorder %v285, %v429
    %vm552 = vcmp.lt.s32.totalorder %v286, %v429
    %vm553 = vcmp.lt.s32.totalorder %v287, %v429
    %vm554 = vcmp.lt.s32.totalorder %v288, %v429
    %vm555 = vcmp.lt.s32.totalorder %v289, %v429
    %vm556 = vcmp.lt.s32.totalorder %v290, %v429
    %vm557 = vcmp.lt.s32.totalorder %v291, %v429
    %vm558 = vmand %vm297, %vm430
    %vm559 = vmand %vm298, %vm431
    %vm560 = vmand %vm299, %vm432
    %vm561 = vmand %vm300, %vm433
    %vm562 = vmand %vm301, %vm434
    %vm563 = vmand %vm302, %vm435
    %vm564 = vmand %vm303, %vm436
    %vm565 = vmand %vm304, %vm437
    %vm566 = vmand %vm305, %vm438
    %vm567 = vmand %vm306, %vm439
    %vm568 = vmand %vm307, %vm440
    %vm569 = vmand %vm308, %vm441
    %vm570 = vmand %vm309, %vm442
    %vm571 = vmand %vm310, %vm443
    %vm572 = vmand %vm311, %vm444
    %vm573 = vmand %vm312, %vm445
    %vm574 = vmand %vm313, %vm446
    %vm575 = vmand %vm314, %vm447
    %vm576 = vmand %vm315, %vm448
    %vm577 = vmand %vm316, %vm449
    %vm578 = vmand %vm317, %vm450
    %vm579 = vmand %vm318, %vm451
    %vm580 = vmand %vm319, %vm452
    %vm581 = vmand %vm320, %vm453
    %vm582 = vmand %vm321, %vm454
    %vm583 = vmand %vm322, %vm455
    %vm584 = vmand %vm323, %vm456
    %vm585 = vmand %vm324, %vm457
    %vm586 = vmand %vm325, %vm458
    %vm587 = vmand %vm326, %vm459
    %vm588 = vmand %vm327, %vm460
    %vm589 = vmand %vm328, %vm461
    %vm590 = vmand %vm329, %vm462
    %vm591 = vmand %vm330, %vm463
    %vm592 = vmand %vm331, %vm464
    %vm593 = vmand %vm332, %vm465
    %vm594 = vmand %vm333, %vm466
    %vm595 = vmand %vm334, %vm467
    %vm596 = vmand %vm335, %vm468
    %vm597 = vmand %vm336, %vm469
    %vm598 = vmand %vm337, %vm470
    %vm599 = vmand %vm338, %vm471
    %vm600 = vmand %vm339, %vm472
    %vm601 = vmand %vm340, %vm473
    %vm602 = vmand %vm341, %vm474
    %vm603 = vmand %vm342, %vm475
    %vm604 = vmand %vm343, %vm476
    %vm605 = vmand %vm344, %vm477
    %vm606 = vmand %vm345, %vm478
    %vm607 = vmand %vm346, %vm479
    %vm608 = vmand %vm347, %vm480
    %vm609 = vmand %vm348, %vm481
    %vm610 = vmand %vm349, %vm482
    %vm611 = vmand %vm350, %vm483
    %vm612 = vmand %vm351, %vm484
    %vm613 = vmand %vm352, %vm485
    %vm614 = vmand %vm353, %vm486
    %vm615 = vmand %vm354, %vm487
    %vm616 = vmand %vm355, %vm488
    %vm617 = vmand %vm356, %vm489
    %vm618 = vmand %vm357, %vm490
    %vm619 = vmand %vm358, %vm491
    %vm620 = vmand %vm359, %vm492
    %vm621 = vmand %vm360, %vm493
    %vm622 = vmand %vm361, %vm494
    %vm623 = vmand %vm362, %vm495
    %vm624 = vmand %vm363, %vm496
    %vm625 = vmand %vm364, %vm497
    %vm626 = vmand %vm365, %vm498
    %vm627 = vmand %vm366, %vm499
    %vm628 = vmand %vm367, %vm500
    %vm629 = vmand %vm368, %vm501
    %vm630 = vmand %vm369, %vm502
    %vm631 = vmand %vm370, %vm503
    %vm632 = vmand %vm371, %vm504
    %vm633 = vmand %vm372, %vm505
    %vm634 = vmand %vm373, %vm506
    %vm635 = vmand %vm374, %vm507
    %vm636 = vmand %vm375, %vm508
    %vm637 = vmand %vm376, %vm509
    %vm638 = vmand %vm377, %vm510
    %vm639 = vmand %vm378, %vm511
    %vm640 = vmand %vm379, %vm512
    %vm641 = vmand %vm380, %vm513
    %vm642 = vmand %vm381, %vm514
    %vm643 = vmand %vm382, %vm515
    %vm644 = vmand %vm383, %vm516
    %vm645 = vmand %vm384, %vm517
    %vm646 = vmand %vm385, %vm518
    %vm647 = vmand %vm386, %vm519
    %vm648 = vmand %vm387, %vm520
    %vm649 = vmand %vm388, %vm521
    %vm650 = vmand %vm389, %vm522
    %vm651 = vmand %vm390, %vm523
    %vm652 = vmand %vm391, %vm524
    %vm653 = vmand %vm392, %vm525
    %vm654 = vmand %vm393, %vm526
    %vm655 = vmand %vm394, %vm527
    %vm656 = vmand %vm395, %vm528
    %vm657 = vmand %vm396, %vm529
    %vm658 = vmand %vm397, %vm530
    %vm659 = vmand %vm398, %vm531
    %vm660 = vmand %vm399, %vm532
    %vm661 = vmand %vm400, %vm533
    %vm662 = vmand %vm401, %vm534
    %vm663 = vmand %vm402, %vm535
    %vm664 = vmand %vm403, %vm536
    %vm665 = vmand %vm404, %vm537
    %vm666 = vmand %vm405, %vm538
    %vm667 = vmand %vm406, %vm539
    %vm668 = vmand %vm407, %vm540
    %vm669 = vmand %vm408, %vm541
    %vm670 = vmand %vm409, %vm542
    %vm671 = vmand %vm410, %vm543
    %vm672 = vmand %vm411, %vm544
    %vm673 = vmand %vm412, %vm545
    %vm674 = vmand %vm413, %vm546
    %vm675 = vmand %vm414, %vm547
    %vm676 = vmand %vm415, %vm548
    %vm677 = vmand %vm416, %vm549
    %vm678 = vmand %vm417, %vm550
    %vm679 = vmand %vm418, %vm551
    %vm680 = vmand %vm419, %vm552
    %vm681 = vmand %vm420, %vm553
    %vm682 = vmand %vm421, %vm554
    %vm683 = vmand %vm422, %vm555
    %vm684 = vmand %vm423, %vm556
    %vm685 = vmand %vm424, %vm557
    %v686 = vld [vmem:[%s3] sm:$0x1]
    %v688 = vlaneseq
    %v689 = vshrl.u32 %v688, 7
    %v690 = vsub.s32 0, %v689
    %v691 = vrot.slane %v686, %v690
    %v693 = vsel %vm558, %v691, 0.0
    %v694 = vsel %vm559, %v691, 0.0
    %v695 = vsel %vm560, %v691, 0.0
    %v696 = vsel %vm561, %v691, 0.0
    %v697 = vsel %vm562, %v691, 0.0
    %v698 = vsel %vm563, %v691, 0.0
    %v699 = vsel %vm564, %v691, 0.0
    %v700 = vsel %vm565, %v691, 0.0
    %v701 = vsel %vm566, %v691, 0.0
    %v702 = vsel %vm567, %v691, 0.0
    %v703 = vsel %vm568, %v691, 0.0
    %v704 = vsel %vm569, %v691, 0.0
    %v705 = vsel %vm570, %v691, 0.0
    %v706 = vsel %vm571, %v691, 0.0
    %v707 = vsel %vm572, %v691, 0.0
    %v708 = vsel %vm573, %v691, 0.0
    %v709 = vsel %vm574, %v691, 0.0
    %v710 = vsel %vm575, %v691, 0.0
    %v711 = vsel %vm576, %v691, 0.0
    %v712 = vsel %vm577, %v691, 0.0
    %v713 = vsel %vm578, %v691, 0.0
    %v714 = vsel %vm579, %v691, 0.0
    %v715 = vsel %vm580, %v691, 0.0
    %v716 = vsel %vm581, %v691, 0.0
    %v717 = vsel %vm582, %v691, 0.0
    %v718 = vsel %vm583, %v691, 0.0
    %v719 = vsel %vm584, %v691, 0.0
    %v720 = vsel %vm585, %v691, 0.0
    %v721 = vsel %vm586, %v691, 0.0
    %v722 = vsel %vm587, %v691, 0.0
    %v723 = vsel %vm588, %v691, 0.0
    %v724 = vsel %vm589, %v691, 0.0
    %v725 = vsel %vm590, %v691, 0.0
    %v726 = vsel %vm591, %v691, 0.0
    %v727 = vsel %vm592, %v691, 0.0
    %v728 = vsel %vm593, %v691, 0.0
    %v729 = vsel %vm594, %v691, 0.0
    %v730 = vsel %vm595, %v691, 0.0
    %v731 = vsel %vm596, %v691, 0.0
    %v732 = vsel %vm597, %v691, 0.0
    %v733 = vsel %vm598, %v691, 0.0
    %v734 = vsel %vm599, %v691, 0.0
    %v735 = vsel %vm600, %v691, 0.0
    %v736 = vsel %vm601, %v691, 0.0
    %v737 = vsel %vm602, %v691, 0.0
    %v738 = vsel %vm603, %v691, 0.0
    %v739 = vsel %vm604, %v691, 0.0
    %v740 = vsel %vm605, %v691, 0.0
    %v741 = vsel %vm606, %v691, 0.0
    %v742 = vsel %vm607, %v691, 0.0
    %v743 = vsel %vm608, %v691, 0.0
    %v744 = vsel %vm609, %v691, 0.0
    %v745 = vsel %vm610, %v691, 0.0
    %v746 = vsel %vm611, %v691, 0.0
    %v747 = vsel %vm612, %v691, 0.0
    %v748 = vsel %vm613, %v691, 0.0
    %v749 = vsel %vm614, %v691, 0.0
    %v750 = vsel %vm615, %v691, 0.0
    %v751 = vsel %vm616, %v691, 0.0
    %v752 = vsel %vm617, %v691, 0.0
    %v753 = vsel %vm618, %v691, 0.0
    %v754 = vsel %vm619, %v691, 0.0
    %v755 = vsel %vm620, %v691, 0.0
    %v756 = vsel %vm621, %v691, 0.0
    %v757 = vsel %vm622, %v691, 0.0
    %v758 = vsel %vm623, %v691, 0.0
    %v759 = vsel %vm624, %v691, 0.0
    %v760 = vsel %vm625, %v691, 0.0
    %v761 = vsel %vm626, %v691, 0.0
    %v762 = vsel %vm627, %v691, 0.0
    %v763 = vsel %vm628, %v691, 0.0
    %v764 = vsel %vm629, %v691, 0.0
    %v765 = vsel %vm630, %v691, 0.0
    %v766 = vsel %vm631, %v691, 0.0
    %v767 = vsel %vm632, %v691, 0.0
    %v768 = vsel %vm633, %v691, 0.0
    %v769 = vsel %vm634, %v691, 0.0
    %v770 = vsel %vm635, %v691, 0.0
    %v771 = vsel %vm636, %v691, 0.0
    %v772 = vsel %vm637, %v691, 0.0
    %v773 = vsel %vm638, %v691, 0.0
    %v774 = vsel %vm639, %v691, 0.0
    %v775 = vsel %vm640, %v691, 0.0
    %v776 = vsel %vm641, %v691, 0.0
    %v777 = vsel %vm642, %v691, 0.0
    %v778 = vsel %vm643, %v691, 0.0
    %v779 = vsel %vm644, %v691, 0.0
    %v780 = vsel %vm645, %v691, 0.0
    %v781 = vsel %vm646, %v691, 0.0
    %v782 = vsel %vm647, %v691, 0.0
    %v783 = vsel %vm648, %v691, 0.0
    %v784 = vsel %vm649, %v691, 0.0
    %v785 = vsel %vm650, %v691, 0.0
    %v786 = vsel %vm651, %v691, 0.0
    %v787 = vsel %vm652, %v691, 0.0
    %v788 = vsel %vm653, %v691, 0.0
    %v789 = vsel %vm654, %v691, 0.0
    %v790 = vsel %vm655, %v691, 0.0
    %v791 = vsel %vm656, %v691, 0.0
    %v792 = vsel %vm657, %v691, 0.0
    %v793 = vsel %vm658, %v691, 0.0
    %v794 = vsel %vm659, %v691, 0.0
    %v795 = vsel %vm660, %v691, 0.0
    %v796 = vsel %vm661, %v691, 0.0
    %v797 = vsel %vm662, %v691, 0.0
    %v798 = vsel %vm663, %v691, 0.0
    %v799 = vsel %vm664, %v691, 0.0
    %v800 = vsel %vm665, %v691, 0.0
    %v801 = vsel %vm666, %v691, 0.0
    %v802 = vsel %vm667, %v691, 0.0
    %v803 = vsel %vm668, %v691, 0.0
    %v804 = vsel %vm669, %v691, 0.0
    %v805 = vsel %vm670, %v691, 0.0
    %v806 = vsel %vm671, %v691, 0.0
    %v807 = vsel %vm672, %v691, 0.0
    %v808 = vsel %vm673, %v691, 0.0
    %v809 = vsel %vm674, %v691, 0.0
    %v810 = vsel %vm675, %v691, 0.0
    %v811 = vsel %vm676, %v691, 0.0
    %v812 = vsel %vm677, %v691, 0.0
    %v813 = vsel %vm678, %v691, 0.0
    %v814 = vsel %vm679, %v691, 0.0
    %v815 = vsel %vm680, %v691, 0.0
    %v816 = vsel %vm681, %v691, 0.0
    %v817 = vsel %vm682, %v691, 0.0
    %v818 = vsel %vm683, %v691, 0.0
    %v819 = vsel %vm684, %v691, 0.0
    %v820 = vsel %vm685, %v691, 0.0
    %v821 = vld [vmem:[#allocation2] sm:$0x3]
    %v822 = vld [vmem:[%s0] sm:$0xff]
    %v823 = vld [vmem:[%s0 + $0x8] sm:$0xff]
    %v824 = vld [vmem:[%s0 + $0x10] sm:$0xff]
    %v825 = vld [vmem:[%s0 + $0x18] sm:$0xff]
    %v826 = vld [vmem:[%s0 + $0x20] sm:$0xff]
    %v827 = vld [vmem:[%s0 + $0x28] sm:$0xff]
    %v828 = vld [vmem:[%s0 + $0x30] sm:$0xff]
    %v829 = vld [vmem:[%s0 + $0x38] sm:$0xff]
    %v830 = vld [vmem:[%s0 + $0x40] sm:$0xff]
    %v831 = vld [vmem:[%s0 + $0x48] sm:$0xff]
    %v832 = vld [vmem:[%s0 + $0x50] sm:$0xff]
    %v833 = vld [vmem:[%s0 + $0x58] sm:$0xff]
    %v834 = vld [vmem:[%s0 + $0x60] sm:$0xff]
    %v835 = vld [vmem:[%s0 + $0x68] sm:$0xff]
    %v836 = vld [vmem:[%s0 + $0x70] sm:$0xff]
    %v837 = vld [vmem:[%s0 + $0x78] sm:$0xff]
    %v838 = vld [vmem:[%s0 + $0x80] sm:$0xff]
    %v839 = vld [vmem:[%s0 + $0x88] sm:$0xff]
    %v840 = vld [vmem:[%s0 + $0x90] sm:$0xff]
    %v841 = vld [vmem:[%s0 + $0x98] sm:$0xff]
    %v842 = vld [vmem:[%s0 + $0xa0] sm:$0xff]
    %v843 = vld [vmem:[%s0 + $0xa8] sm:$0xff]
    %v844 = vld [vmem:[%s0 + $0xb0] sm:$0xff]
    %v845 = vld [vmem:[%s0 + $0xb8] sm:$0xff]
    %v846 = vld [vmem:[%s0 + $0xc0] sm:$0xff]
    %v847 = vld [vmem:[%s0 + $0xc8] sm:$0xff]
    %v848 = vld [vmem:[%s0 + $0xd0] sm:$0xff]
    %v849 = vld [vmem:[%s0 + $0xd8] sm:$0xff]
    %v850 = vld [vmem:[%s0 + $0xe0] sm:$0xff]
    %v851 = vld [vmem:[%s0 + $0xe8] sm:$0xff]
    %v852 = vld [vmem:[%s0 + $0xf0] sm:$0xff]
    %v853 = vld [vmem:[%s0 + $0xf8] sm:$0xff]
    %v854 = vld [vmem:[%s0 + $0x100] sm:$0xff]
    %v855 = vld [vmem:[%s0 + $0x108] sm:$0xff]
    %v856 = vld [vmem:[%s0 + $0x110] sm:$0xff]
    %v857 = vld [vmem:[%s0 + $0x118] sm:$0xff]
    %v858 = vld [vmem:[%s0 + $0x120] sm:$0xff]
    %v859 = vld [vmem:[%s0 + $0x128] sm:$0xff]
    %v860 = vld [vmem:[%s0 + $0x130] sm:$0xff]
    %v861 = vld [vmem:[%s0 + $0x138] sm:$0xff]
    %v862 = vld [vmem:[%s0 + $0x140] sm:$0xff]
    %v863 = vld [vmem:[%s0 + $0x148] sm:$0xff]
    %v864 = vld [vmem:[%s0 + $0x150] sm:$0xff]
    %v865 = vld [vmem:[%s0 + $0x158] sm:$0xff]
    %v866 = vld [vmem:[%s0 + $0x160] sm:$0xff]
    %v867 = vld [vmem:[%s0 + $0x168] sm:$0xff]
    %v868 = vld [vmem:[%s0 + $0x170] sm:$0xff]
    %v869 = vld [vmem:[%s0 + $0x178] sm:$0xff]
    %v870 = vld [vmem:[%s0 + $0x180] sm:$0xff]
    %v871 = vld [vmem:[%s0 + $0x188] sm:$0xff]
    %v872 = vld [vmem:[%s0 + $0x190] sm:$0xff]
    %v873 = vld [vmem:[%s0 + $0x198] sm:$0xff]
    %v874 = vld [vmem:[%s0 + $0x1a0] sm:$0xff]
    %v875 = vld [vmem:[%s0 + $0x1a8] sm:$0xff]
    %v876 = vld [vmem:[%s0 + $0x1b0] sm:$0xff]
    %v877 = vld [vmem:[%s0 + $0x1b8] sm:$0xff]
    %v878 = vld [vmem:[%s0 + $0x1c0] sm:$0xff]
    %v879 = vld [vmem:[%s0 + $0x1c8] sm:$0xff]
    %v880 = vld [vmem:[%s0 + $0x1d0] sm:$0xff]
    %v881 = vld [vmem:[%s0 + $0x1d8] sm:$0xff]
    %v882 = vld [vmem:[%s0 + $0x1e0] sm:$0xff]
    %v883 = vld [vmem:[%s0 + $0x1e8] sm:$0xff]
    %v884 = vld [vmem:[%s0 + $0x1f0] sm:$0xff]
    %v885 = vld [vmem:[%s0 + $0x1f8] sm:$0xff]
    %v886 = vld [vmem:[%s0 + $0x200] sm:$0xff]
    %v887 = vld [vmem:[%s0 + $0x208] sm:$0xff]
    %v888 = vld [vmem:[%s0 + $0x210] sm:$0xff]
    %v889 = vld [vmem:[%s0 + $0x218] sm:$0xff]
    %v890 = vld [vmem:[%s0 + $0x220] sm:$0xff]
    %v891 = vld [vmem:[%s0 + $0x228] sm:$0xff]
    %v892 = vld [vmem:[%s0 + $0x230] sm:$0xff]
    %v893 = vld [vmem:[%s0 + $0x238] sm:$0xff]
    %v894 = vld [vmem:[%s0 + $0x240] sm:$0xff]
    %v895 = vld [vmem:[%s0 + $0x248] sm:$0xff]
    %v896 = vld [vmem:[%s0 + $0x250] sm:$0xff]
    %v897 = vld [vmem:[%s0 + $0x258] sm:$0xff]
    %v898 = vld [vmem:[%s0 + $0x260] sm:$0xff]
    %v899 = vld [vmem:[%s0 + $0x268] sm:$0xff]
    %v900 = vld [vmem:[%s0 + $0x270] sm:$0xff]
    %v901 = vld [vmem:[%s0 + $0x278] sm:$0xff]
    %v902 = vld [vmem:[%s0 + $0x280] sm:$0xff]
    %v903 = vld [vmem:[%s0 + $0x288] sm:$0xff]
    %v904 = vld [vmem:[%s0 + $0x290] sm:$0xff]
    %v905 = vld [vmem:[%s0 + $0x298] sm:$0xff]
    %v906 = vld [vmem:[%s0 + $0x2a0] sm:$0xff]
    %v907 = vld [vmem:[%s0 + $0x2a8] sm:$0xff]
    %v908 = vld [vmem:[%s0 + $0x2b0] sm:$0xff]
    %v909 = vld [vmem:[%s0 + $0x2b8] sm:$0xff]
    %v910 = vld [vmem:[%s0 + $0x2c0] sm:$0xff]
    %v911 = vld [vmem:[%s0 + $0x2c8] sm:$0xff]
    %v912 = vld [vmem:[%s0 + $0x2d0] sm:$0xff]
    %v913 = vld [vmem:[%s0 + $0x2d8] sm:$0xff]
    %v914 = vld [vmem:[%s0 + $0x2e0] sm:$0xff]
    %v915 = vld [vmem:[%s0 + $0x2e8] sm:$0xff]
    %v916 = vld [vmem:[%s0 + $0x2f0] sm:$0xff]
    %v917 = vld [vmem:[%s0 + $0x2f8] sm:$0xff]
    %v918 = vld [vmem:[%s0 + $0x300] sm:$0xff]
    %v919 = vld [vmem:[%s0 + $0x308] sm:$0xff]
    %v920 = vld [vmem:[%s0 + $0x310] sm:$0xff]
    %v921 = vld [vmem:[%s0 + $0x318] sm:$0xff]
    %v922 = vld [vmem:[%s0 + $0x320] sm:$0xff]
    %v923 = vld [vmem:[%s0 + $0x328] sm:$0xff]
    %v924 = vld [vmem:[%s0 + $0x330] sm:$0xff]
    %v925 = vld [vmem:[%s0 + $0x338] sm:$0xff]
    %v926 = vld [vmem:[%s0 + $0x340] sm:$0xff]
    %v927 = vld [vmem:[%s0 + $0x348] sm:$0xff]
    %v928 = vld [vmem:[%s0 + $0x350] sm:$0xff]
    %v929 = vld [vmem:[%s0 + $0x358] sm:$0xff]
    %v930 = vld [vmem:[%s0 + $0x360] sm:$0xff]
    %v931 = vld [vmem:[%s0 + $0x368] sm:$0xff]
    %v932 = vld [vmem:[%s0 + $0x370] sm:$0xff]
    %v933 = vld [vmem:[%s0 + $0x378] sm:$0xff]
    %v934 = vld [vmem:[%s0 + $0x380] sm:$0xff]
    %v935 = vld [vmem:[%s0 + $0x388] sm:$0xff]
    %v936 = vld [vmem:[%s0 + $0x390] sm:$0xff]
    %v937 = vld [vmem:[%s0 + $0x398] sm:$0xff]
    %v938 = vld [vmem:[%s0 + $0x3a0] sm:$0xff]
    %v939 = vld [vmem:[%s0 + $0x3a8] sm:$0xff]
    %v940 = vld [vmem:[%s0 + $0x3b0] sm:$0xff]
    %v941 = vld [vmem:[%s0 + $0x3b8] sm:$0xff]
    %v942 = vld [vmem:[%s0 + $0x3c0] sm:$0xff]
    %v943 = vld [vmem:[%s0 + $0x3c8] sm:$0xff]
    %v944 = vld [vmem:[%s0 + $0x3d0] sm:$0xff]
    %v945 = vld [vmem:[%s0 + $0x3d8] sm:$0xff]
    %v946 = vld [vmem:[%s0 + $0x3e0] sm:$0xff]
    %v947 = vld [vmem:[%s0 + $0x3e8] sm:$0xff]
    %v948 = vld [vmem:[%s0 + $0x3f0] sm:$0xff]
    %v949 = vld [vmem:[%s0 + $0x3f8] sm:$0xff]
    %950 = vxpose.xlu0.b32.start [1/16] %v693, 128
    %951 = vxpose.xlu0.b32.cont [2/16] %v694, 128
    %952 = vxpose.xlu0.b32.cont [3/16] %v695, 128
    %953 = vxpose.xlu0.b32.cont [4/16] %v696, 128
    %954 = vxpose.xlu0.b32.cont [5/16] %v697, 128
    %955 = vxpose.xlu0.b32.cont [6/16] %v698, 128
    %956 = vxpose.xlu0.b32.cont [7/16] %v699, 128
    %957 = vxpose.xlu0.b32.cont [8/16] %v700, 128
    %958 = vxpose.xlu0.b32.cont [9/16] %v701, 128
    %959 = vxpose.xlu0.b32.cont [10/16] %v702, 128
    %960 = vxpose.xlu0.b32.cont [11/16] %v703, 128
    %961 = vxpose.xlu0.b32.cont [12/16] %v704, 128
    %962 = vxpose.xlu0.b32.cont [13/16] %v705, 128
    %963 = vxpose.xlu0.b32.cont [14/16] %v706, 128
    %964 = vxpose.xlu0.b32.cont [15/16] %v707, 128
    %965 = vxpose.xlu0.b32.end [16/16] %v708, 128
    %v966 = vpop.trf.xlu0
    %v967 = vpop.trf.xlu0
    %v968 = vpop.trf.xlu0
    %v969 = vpop.trf.xlu0
    %v970 = vpop.trf.xlu0
    %v971 = vpop.trf.xlu0
    %v972 = vpop.trf.xlu0
    %v973 = vpop.trf.xlu0
    %v974 = vpop.trf.xlu0
    %v975 = vpop.trf.xlu0
    %v976 = vpop.trf.xlu0
    %v977 = vpop.trf.xlu0
    %v978 = vpop.trf.xlu0
    %v979 = vpop.trf.xlu0
    %v980 = vpop.trf.xlu0
    %v981 = vpop.trf.xlu0
    %982 = vxpose.xlu0.b32.start [1/16] %v709, 128
    %983 = vxpose.xlu0.b32.cont [2/16] %v710, 128
    %984 = vxpose.xlu0.b32.cont [3/16] %v711, 128
    %985 = vxpose.xlu0.b32.cont [4/16] %v712, 128
    %986 = vxpose.xlu0.b32.cont [5/16] %v713, 128
    %987 = vxpose.xlu0.b32.cont [6/16] %v714, 128
    %988 = vxpose.xlu0.b32.cont [7/16] %v715, 128
    %989 = vxpose.xlu0.b32.cont [8/16] %v716, 128
    %990 = vxpose.xlu0.b32.cont [9/16] %v717, 128
    %991 = vxpose.xlu0.b32.cont [10/16] %v718, 128
    %992 = vxpose.xlu0.b32.cont [11/16] %v719, 128
    %993 = vxpose.xlu0.b32.cont [12/16] %v720, 128
    %994 = vxpose.xlu0.b32.cont [13/16] %v721, 128
    %995 = vxpose.xlu0.b32.cont [14/16] %v722, 128
    %996 = vxpose.xlu0.b32.cont [15/16] %v723, 128
    %997 = vxpose.xlu0.b32.end [16/16] %v724, 128
    %v998 = vpop.trf.xlu0
    %v999 = vpop.trf.xlu0
    %v1000 = vpop.trf.xlu0
    %v1001 = vpop.trf.xlu0
    %v1002 = vpop.trf.xlu0
    %v1003 = vpop.trf.xlu0
    %v1004 = vpop.trf.xlu0
    %v1005 = vpop.trf.xlu0
    %v1006 = vpop.trf.xlu0
    %v1007 = vpop.trf.xlu0
    %v1008 = vpop.trf.xlu0
    %v1009 = vpop.trf.xlu0
    %v1010 = vpop.trf.xlu0
    %v1011 = vpop.trf.xlu0
    %v1012 = vpop.trf.xlu0
    %v1013 = vpop.trf.xlu0
    %1014 = vxpose.xlu0.b32.start [1/16] %v725, 128
    %1015 = vxpose.xlu0.b32.cont [2/16] %v726, 128
    %1016 = vxpose.xlu0.b32.cont [3/16] %v727, 128
    %1017 = vxpose.xlu0.b32.cont [4/16] %v728, 128
    %1018 = vxpose.xlu0.b32.cont [5/16] %v729, 128
    %1019 = vxpose.xlu0.b32.cont [6/16] %v730, 128
    %1020 = vxpose.xlu0.b32.cont [7/16] %v731, 128
    %1021 = vxpose.xlu0.b32.cont [8/16] %v732, 128
    %1022 = vxpose.xlu0.b32.cont [9/16] %v733, 128
    %1023 = vxpose.xlu0.b32.cont [10/16] %v734, 128
    %1024 = vxpose.xlu0.b32.cont [11/16] %v735, 128
    %1025 = vxpose.xlu0.b32.cont [12/16] %v736, 128
    %1026 = vxpose.xlu0.b32.cont [13/16] %v737, 128
    %1027 = vxpose.xlu0.b32.cont [14/16] %v738, 128
    %1028 = vxpose.xlu0.b32.cont [15/16] %v739, 128
    %1029 = vxpose.xlu0.b32.end [16/16] %v740, 128
    %v1030 = vpop.trf.xlu0
    %v1031 = vpop.trf.xlu0
    %v1032 = vpop.trf.xlu0
    %v1033 = vpop.trf.xlu0
    %v1034 = vpop.trf.xlu0
    %v1035 = vpop.trf.xlu0
    %v1036 = vpop.trf.xlu0
    %v1037 = vpop.trf.xlu0
    %v1038 = vpop.trf.xlu0
    %v1039 = vpop.trf.xlu0
    %v1040 = vpop.trf.xlu0
    %v1041 = vpop.trf.xlu0
    %v1042 = vpop.trf.xlu0
    %v1043 = vpop.trf.xlu0
    %v1044 = vpop.trf.xlu0
    %v1045 = vpop.trf.xlu0
    %1046 = vxpose.xlu0.b32.start [1/16] %v741, 128
    %1047 = vxpose.xlu0.b32.cont [2/16] %v742, 128
    %1048 = vxpose.xlu0.b32.cont [3/16] %v743, 128
    %1049 = vxpose.xlu0.b32.cont [4/16] %v744, 128
    %1050 = vxpose.xlu0.b32.cont [5/16] %v745, 128
    %1051 = vxpose.xlu0.b32.cont [6/16] %v746, 128
    %1052 = vxpose.xlu0.b32.cont [7/16] %v747, 128
    %1053 = vxpose.xlu0.b32.cont [8/16] %v748, 128
    %1054 = vxpose.xlu0.b32.cont [9/16] %v749, 128
    %1055 = vxpose.xlu0.b32.cont [10/16] %v750, 128
    %1056 = vxpose.xlu0.b32.cont [11/16] %v751, 128
    %1057 = vxpose.xlu0.b32.cont [12/16] %v752, 128
    %1058 = vxpose.xlu0.b32.cont [13/16] %v753, 128
    %1059 = vxpose.xlu0.b32.cont [14/16] %v754, 128
    %1060 = vxpose.xlu0.b32.cont [15/16] %v755, 128
    %1061 = vxpose.xlu0.b32.end [16/16] %v756, 128
    %v1062 = vpop.trf.xlu0
    %v1063 = vpop.trf.xlu0
    %v1064 = vpop.trf.xlu0
    %v1065 = vpop.trf.xlu0
    %v1066 = vpop.trf.xlu0
    %v1067 = vpop.trf.xlu0
    %v1068 = vpop.trf.xlu0
    %v1069 = vpop.trf.xlu0
    %v1070 = vpop.trf.xlu0
    %v1071 = vpop.trf.xlu0
    %v1072 = vpop.trf.xlu0
    %v1073 = vpop.trf.xlu0
    %v1074 = vpop.trf.xlu0
    %v1075 = vpop.trf.xlu0
    %v1076 = vpop.trf.xlu0
    %v1077 = vpop.trf.xlu0
    %1078 = vxpose.xlu0.b32.start [1/16] %v757, 128
    %1079 = vxpose.xlu0.b32.cont [2/16] %v758, 128
    %1080 = vxpose.xlu0.b32.cont [3/16] %v759, 128
    %1081 = vxpose.xlu0.b32.cont [4/16] %v760, 128
    %1082 = vxpose.xlu0.b32.cont [5/16] %v761, 128
    %1083 = vxpose.xlu0.b32.cont [6/16] %v762, 128
    %1084 = vxpose.xlu0.b32.cont [7/16] %v763, 128
    %1085 = vxpose.xlu0.b32.cont [8/16] %v764, 128
    %1086 = vxpose.xlu0.b32.cont [9/16] %v765, 128
    %1087 = vxpose.xlu0.b32.cont [10/16] %v766, 128
    %1088 = vxpose.xlu0.b32.cont [11/16] %v767, 128
    %1089 = vxpose.xlu0.b32.cont [12/16] %v768, 128
    %1090 = vxpose.xlu0.b32.cont [13/16] %v769, 128
    %1091 = vxpose.xlu0.b32.cont [14/16] %v770, 128
    %1092 = vxpose.xlu0.b32.cont [15/16] %v771, 128
    %1093 = vxpose.xlu0.b32.end [16/16] %v772, 128
    %v1094 = vpop.trf.xlu0
    %v1095 = vpop.trf.xlu0
    %v1096 = vpop.trf.xlu0
    %v1097 = vpop.trf.xlu0
    %v1098 = vpop.trf.xlu0
    %v1099 = vpop.trf.xlu0
    %v1100 = vpop.trf.xlu0
    %v1101 = vpop.trf.xlu0
    %v1102 = vpop.trf.xlu0
    %v1103 = vpop.trf.xlu0
    %v1104 = vpop.trf.xlu0
    %v1105 = vpop.trf.xlu0
    %v1106 = vpop.trf.xlu0
    %v1107 = vpop.trf.xlu0
    %v1108 = vpop.trf.xlu0
    %v1109 = vpop.trf.xlu0
    %1110 = vxpose.xlu0.b32.start [1/16] %v773, 128
    %1111 = vxpose.xlu0.b32.cont [2/16] %v774, 128
    %1112 = vxpose.xlu0.b32.cont [3/16] %v775, 128
    %1113 = vxpose.xlu0.b32.cont [4/16] %v776, 128
    %1114 = vxpose.xlu0.b32.cont [5/16] %v777, 128
    %1115 = vxpose.xlu0.b32.cont [6/16] %v778, 128
    %1116 = vxpose.xlu0.b32.cont [7/16] %v779, 128
    %1117 = vxpose.xlu0.b32.cont [8/16] %v780, 128
    %1118 = vxpose.xlu0.b32.cont [9/16] %v781, 128
    %1119 = vxpose.xlu0.b32.cont [10/16] %v782, 128
    %1120 = vxpose.xlu0.b32.cont [11/16] %v783, 128
    %1121 = vxpose.xlu0.b32.cont [12/16] %v784, 128
    %1122 = vxpose.xlu0.b32.cont [13/16] %v785, 128
    %1123 = vxpose.xlu0.b32.cont [14/16] %v786, 128
    %1124 = vxpose.xlu0.b32.cont [15/16] %v787, 128
    %1125 = vxpose.xlu0.b32.end [16/16] %v788, 128
    %v1126 = vpop.trf.xlu0
    %v1127 = vpop.trf.xlu0
    %v1128 = vpop.trf.xlu0
    %v1129 = vpop.trf.xlu0
    %v1130 = vpop.trf.xlu0
    %v1131 = vpop.trf.xlu0
    %v1132 = vpop.trf.xlu0
    %v1133 = vpop.trf.xlu0
    %v1134 = vpop.trf.xlu0
    %v1135 = vpop.trf.xlu0
    %v1136 = vpop.trf.xlu0
    %v1137 = vpop.trf.xlu0
    %v1138 = vpop.trf.xlu0
    %v1139 = vpop.trf.xlu0
    %v1140 = vpop.trf.xlu0
    %v1141 = vpop.trf.xlu0
    %1142 = vxpose.xlu0.b32.start [1/16] %v789, 128
    %1143 = vxpose.xlu0.b32.cont [2/16] %v790, 128
    %1144 = vxpose.xlu0.b32.cont [3/16] %v791, 128
    %1145 = vxpose.xlu0.b32.cont [4/16] %v792, 128
    %1146 = vxpose.xlu0.b32.cont [5/16] %v793, 128
    %1147 = vxpose.xlu0.b32.cont [6/16] %v794, 128
    %1148 = vxpose.xlu0.b32.cont [7/16] %v795, 128
    %1149 = vxpose.xlu0.b32.cont [8/16] %v796, 128
    %1150 = vxpose.xlu0.b32.cont [9/16] %v797, 128
    %1151 = vxpose.xlu0.b32.cont [10/16] %v798, 128
    %1152 = vxpose.xlu0.b32.cont [11/16] %v799, 128
    %1153 = vxpose.xlu0.b32.cont [12/16] %v800, 128
    %1154 = vxpose.xlu0.b32.cont [13/16] %v801, 128
    %1155 = vxpose.xlu0.b32.cont [14/16] %v802, 128
    %1156 = vxpose.xlu0.b32.cont [15/16] %v803, 128
    %1157 = vxpose.xlu0.b32.end [16/16] %v804, 128
    %v1158 = vpop.trf.xlu0
    %v1159 = vpop.trf.xlu0
    %v1160 = vpop.trf.xlu0
    %v1161 = vpop.trf.xlu0
    %v1162 = vpop.trf.xlu0
    %v1163 = vpop.trf.xlu0
    %v1164 = vpop.trf.xlu0
    %v1165 = vpop.trf.xlu0
    %v1166 = vpop.trf.xlu0
    %v1167 = vpop.trf.xlu0
    %v1168 = vpop.trf.xlu0
    %v1169 = vpop.trf.xlu0
    %v1170 = vpop.trf.xlu0
    %v1171 = vpop.trf.xlu0
    %v1172 = vpop.trf.xlu0
    %v1173 = vpop.trf.xlu0
    %1174 = vxpose.xlu0.b32.start [1/16] %v805, 128
    %1175 = vxpose.xlu0.b32.cont [2/16] %v806, 128
    %1176 = vxpose.xlu0.b32.cont [3/16] %v807, 128
    %1177 = vxpose.xlu0.b32.cont [4/16] %v808, 128
    %1178 = vxpose.xlu0.b32.cont [5/16] %v809, 128
    %1179 = vxpose.xlu0.b32.cont [6/16] %v810, 128
    %1180 = vxpose.xlu0.b32.cont [7/16] %v811, 128
    %1181 = vxpose.xlu0.b32.cont [8/16] %v812, 128
    %1182 = vxpose.xlu0.b32.cont [9/16] %v813, 128
    %1183 = vxpose.xlu0.b32.cont [10/16] %v814, 128
    %1184 = vxpose.xlu0.b32.cont [11/16] %v815, 128
    %1185 = vxpose.xlu0.b32.cont [12/16] %v816, 128
    %1186 = vxpose.xlu0.b32.cont [13/16] %v817, 128
    %1187 = vxpose.xlu0.b32.cont [14/16] %v818, 128
    %1188 = vxpose.xlu0.b32.cont [15/16] %v819, 128
    %1189 = vxpose.xlu0.b32.end [16/16] %v820, 128
    %v1190 = vpop.trf.xlu0
    %v1191 = vpop.trf.xlu0
    %v1192 = vpop.trf.xlu0
    %v1193 = vpop.trf.xlu0
    %v1194 = vpop.trf.xlu0
    %v1195 = vpop.trf.xlu0
    %v1196 = vpop.trf.xlu0
    %v1197 = vpop.trf.xlu0
    %v1198 = vpop.trf.xlu0
    %v1199 = vpop.trf.xlu0
    %v1200 = vpop.trf.xlu0
    %v1201 = vpop.trf.xlu0
    %v1202 = vpop.trf.xlu0
    %v1203 = vpop.trf.xlu0
    %v1204 = vpop.trf.xlu0
    %v1205 = vpop.trf.xlu0
    %1206 = vmatprep.subr.mxu0 0.0
    %1207 = vmatpush1.msra.mxu0 %v822
    %1208 = vmatprep.subr.mxu0 0.0
    %1209 = vmatpush1.msra.mxu0 %v823
    %1210 = vmatprep.subr.mxu0 0.0
    %1211 = vmatpush1.msra.mxu0 %v824
    %1212 = vmatprep.subr.mxu0 0.0
    %1213 = vmatpush1.msra.mxu0 %v825
    %1214 = vmatprep.subr.mxu0 0.0
    %1215 = vmatpush1.msra.mxu0 %v826
    %1216 = vmatprep.subr.mxu0 0.0
    %1217 = vmatpush1.msra.mxu0 %v827
    %1218 = vmatprep.subr.mxu0 0.0
    %1219 = vmatpush1.msra.mxu0 %v828
    %1220 = vmatprep.subr.mxu0 0.0
    %1221 = vmatpush1.msra.mxu0 %v829
    %1222 = vmatprep.subr.mxu0 0.0
    %1223 = vmatpush1.msra.mxu0 %v830
    %1224 = vmatprep.subr.mxu0 0.0
    %1225 = vmatpush1.msra.mxu0 %v831
    %1226 = vmatprep.subr.mxu0 0.0
    %1227 = vmatpush1.msra.mxu0 %v832
    %1228 = vmatprep.subr.mxu0 0.0
    %1229 = vmatpush1.msra.mxu0 %v833
    %1230 = vmatprep.subr.mxu0 0.0
    %1231 = vmatpush1.msra.mxu0 %v834
    %1232 = vmatprep.subr.mxu0 0.0
    %1233 = vmatpush1.msra.mxu0 %v835
    %1234 = vmatprep.subr.mxu0 0.0
    %1235 = vmatpush1.msra.mxu0 %v836
    %1236 = vmatprep.subr.mxu0 0.0
    %1237 = vmatpush1.msra.mxu0 %v837
    %1238 = vmatprep.subr.mxu0 0.0
    %1239 = vmatpush1.msra.mxu0 %v838
    %1240 = vmatprep.subr.mxu0 0.0
    %1241 = vmatpush1.msra.mxu0 %v839
    %1242 = vmatprep.subr.mxu0 0.0
    %1243 = vmatpush1.msra.mxu0 %v840
    %1244 = vmatprep.subr.mxu0 0.0
    %1245 = vmatpush1.msra.mxu0 %v841
    %1246 = vmatprep.subr.mxu0 0.0
    %1247 = vmatpush1.msra.mxu0 %v842
    %1248 = vmatprep.subr.mxu0 0.0
    %1249 = vmatpush1.msra.mxu0 %v843
    %1250 = vmatprep.subr.mxu0 0.0
    %1251 = vmatpush1.msra.mxu0 %v844
    %1252 = vmatprep.subr.mxu0 0.0
    %1253 = vmatpush1.msra.mxu0 %v845
    %1254 = vmatprep.subr.mxu0 0.0
    %1255 = vmatpush1.msra.mxu0 %v846
    %1256 = vmatprep.subr.mxu0 0.0
    %1257 = vmatpush1.msra.mxu0 %v847
    %1258 = vmatprep.subr.mxu0 0.0
    %1259 = vmatpush1.msra.mxu0 %v848
    %1260 = vmatprep.subr.mxu0 0.0
    %1261 = vmatpush1.msra.mxu0 %v849
    %1262 = vmatprep.subr.mxu0 0.0
    %1263 = vmatpush1.msra.mxu0 %v850
    %1264 = vmatprep.subr.mxu0 0.0
    %1265 = vmatpush1.msra.mxu0 %v851
    %1266 = vmatprep.subr.mxu0 0.0
    %1267 = vmatpush1.msra.mxu0 %v852
    %1268 = vmatprep.subr.mxu0 0.0
    %1269 = vmatpush1.msra.mxu0 %v853
    %1270 = vmatprep.mubr.f32.mxu0 %v998
    %1271 = vmatmul.mubr.f32.gmra.mrb[0].mxu0 %v966
    %v1272 = vpop.f32.mrb[0].mxu0
    %v1273 = vadd.f32 0.0, %v1272
    %v1274 = vpop.f32.mrb[0].mxu0
    %1275 = vdwg.mxu0
    %1276 = vmatprep.subr.mxu0 0.0
    %1277 = vmatpush1.msra.mxu0 %v854
    %1278 = vmatprep.subr.mxu0 0.0
    %1279 = vmatpush1.msra.mxu0 %v855
    %1280 = vmatprep.subr.mxu0 0.0
    %1281 = vmatpush1.msra.mxu0 %v856
    %1282 = vmatprep.subr.mxu0 0.0
    %1283 = vmatpush1.msra.mxu0 %v857
    %1284 = vmatprep.subr.mxu0 0.0
    %1285 = vmatpush1.msra.mxu0 %v858
    %1286 = vmatprep.subr.mxu0 0.0
    %1287 = vmatpush1.msra.mxu0 %v859
    %1288 = vmatprep.subr.mxu0 0.0
    %1289 = vmatpush1.msra.mxu0 %v860
    %1290 = vmatprep.subr.mxu0 0.0
    %1291 = vmatpush1.msra.mxu0 %v861
    %1292 = vmatprep.subr.mxu0 0.0
    %1293 = vmatpush1.msra.mxu0 %v862
    %1294 = vmatprep.subr.mxu0 0.0
    %1295 = vmatpush1.msra.mxu0 %v863
    %1296 = vmatprep.subr.mxu0 0.0
    %1297 = vmatpush1.msra.mxu0 %v864
    %1298 = vmatprep.subr.mxu0 0.0
    %1299 = vmatpush1.msra.mxu0 %v865
    %1300 = vmatprep.subr.mxu0 0.0
    %1301 = vmatpush1.msra.mxu0 %v866
    %1302 = vmatprep.subr.mxu0 0.0
    %1303 = vmatpush1.msra.mxu0 %v867
    %1304 = vmatprep.subr.mxu0 0.0
    %1305 = vmatpush1.msra.mxu0 %v868
    %1306 = vmatprep.subr.mxu0 0.0
    %1307 = vmatpush1.msra.mxu0 %v869
    %1308 = vmatprep.subr.mxu0 0.0
    %1309 = vmatpush1.msra.mxu0 %v870
    %1310 = vmatprep.subr.mxu0 0.0
    %1311 = vmatpush1.msra.mxu0 %v871
    %1312 = vmatprep.subr.mxu0 0.0
    %1313 = vmatpush1.msra.mxu0 %v872
    %1314 = vmatprep.subr.mxu0 0.0
    %1315 = vmatpush1.msra.mxu0 %v873
    %1316 = vmatprep.subr.mxu0 0.0
    %1317 = vmatpush1.msra.mxu0 %v874
    %1318 = vmatprep.subr.mxu0 0.0
    %1319 = vmatpush1.msra.mxu0 %v875
    %1320 = vmatprep.subr.mxu0 0.0
    %1321 = vmatpush1.msra.mxu0 %v876
    %1322 = vmatprep.subr.mxu0 0.0
    %1323 = vmatpush1.msra.mxu0 %v877
    %1324 = vmatprep.subr.mxu0 0.0
    %1325 = vmatpush1.msra.mxu0 %v878
    %1326 = vmatprep.subr.mxu0 0.0
    %1327 = vmatpush1.msra.mxu0 %v879
    %1328 = vmatprep.subr.mxu0 0.0
    %1329 = vmatpush1.msra.mxu0 %v880
    %1330 = vmatprep.subr.mxu0 0.0
    %1331 = vmatpush1.msra.mxu0 %v881
    %1332 = vmatprep.subr.mxu0 0.0
    %1333 = vmatpush1.msra.mxu0 %v882
    %1334 = vmatprep.subr.mxu0 0.0
    %1335 = vmatpush1.msra.mxu0 %v883
    %1336 = vmatprep.subr.mxu0 0.0
    %1337 = vmatpush1.msra.mxu0 %v884
    %1338 = vmatprep.subr.mxu0 0.0
    %1339 = vmatpush1.msra.mxu0 %v885
    %1340 = vmatprep.mubr.f32.mxu0 %v1062
    %1341 = vmatmul.mubr.f32.gmra.mrb[0].mxu0 %v1030
    %v1342 = vpop.f32.mrb[0].mxu0
    %v1343 = vadd.f32 %v1273, %v1342
    %v1344 = vpop.f32.mrb[0].mxu0
    %1345 = vdwg.mxu0
    %1346 = vmatprep.subr.mxu0 0.0
    %1347 = vmatpush1.msra.mxu0 %v886
    %1348 = vmatprep.subr.mxu0 0.0
    %1349 = vmatpush1.msra.mxu0 %v887
    %1350 = vmatprep.subr.mxu0 0.0
    %1351 = vmatpush1.msra.mxu0 %v888
    %1352 = vmatprep.subr.mxu0 0.0
    %1353 = vmatpush1.msra.mxu0 %v889
    %1354 = vmatprep.subr.mxu0 0.0
    %1355 = vmatpush1.msra.mxu0 %v890
    %1356 = vmatprep.subr.mxu0 0.0
    %1357 = vmatpush1.msra.mxu0 %v891
    %1358 = vmatprep.subr.mxu0 0.0
    %1359 = vmatpush1.msra.mxu0 %v892
    %1360 = vmatprep.subr.mxu0 0.0
    %1361 = vmatpush1.msra.mxu0 %v893
    %1362 = vmatprep.subr.mxu0 0.0
    %1363 = vmatpush1.msra.mxu0 %v894
    %1364 = vmatprep.subr.mxu0 0.0
    %1365 = vmatpush1.msra.mxu0 %v895
    %1366 = vmatprep.subr.mxu0 0.0
    %1367 = vmatpush1.msra.mxu0 %v896
    %1368 = vmatprep.subr.mxu0 0.0
    %1369 = vmatpush1.msra.mxu0 %v897
    %1370 = vmatprep.subr.mxu0 0.0
    %1371 = vmatpush1.msra.mxu0 %v898
    %1372 = vmatprep.subr.mxu0 0.0
    %1373 = vmatpush1.msra.mxu0 %v899
    %1374 = vmatprep.subr.mxu0 0.0
    %1375 = vmatpush1.msra.mxu0 %v900
    %1376 = vmatprep.subr.mxu0 0.0
    %1377 = vmatpush1.msra.mxu0 %v901
    %1378 = vmatprep.subr.mxu0 0.0
    %1379 = vmatpush1.msra.mxu0 %v902
    %1380 = vmatprep.subr.mxu0 0.0
    %1381 = vmatpush1.msra.mxu0 %v903
    %1382 = vmatprep.subr.mxu0 0.0
    %1383 = vmatpush1.msra.mxu0 %v904
    %1384 = vmatprep.subr.mxu0 0.0
    %1385 = vmatpush1.msra.mxu0 %v905
    %1386 = vmatprep.subr.mxu0 0.0
    %1387 = vmatpush1.msra.mxu0 %v906
    %1388 = vmatprep.subr.mxu0 0.0
    %1389 = vmatpush1.msra.mxu0 %v907
    %1390 = vmatprep.subr.mxu0 0.0
    %1391 = vmatpush1.msra.mxu0 %v908
    %1392 = vmatprep.subr.mxu0 0.0
    %1393 = vmatpush1.msra.mxu0 %v909
    %1394 = vmatprep.subr.mxu0 0.0
    %1395 = vmatpush1.msra.mxu0 %v910
    %1396 = vmatprep.subr.mxu0 0.0
    %1397 = vmatpush1.msra.mxu0 %v911
    %1398 = vmatprep.subr.mxu0 0.0
    %1399 = vmatpush1.msra.mxu0 %v912
    %1400 = vmatprep.subr.mxu0 0.0
    %1401 = vmatpush1.msra.mxu0 %v913
    %1402 = vmatprep.subr.mxu0 0.0
    %1403 = vmatpush1.msra.mxu0 %v914
    %1404 = vmatprep.subr.mxu0 0.0
    %1405 = vmatpush1.msra.mxu0 %v915
    %1406 = vmatprep.subr.mxu0 0.0
    %1407 = vmatpush1.msra.mxu0 %v916
    %1408 = vmatprep.subr.mxu0 0.0
    %1409 = vmatpush1.msra.mxu0 %v917
    %1410 = vmatprep.mubr.f32.mxu0 %v1126
    %1411 = vmatmul.mubr.f32.gmra.mrb[0].mxu0 %v1094
    %v1412 = vpop.f32.mrb[0].mxu0
    %v1413 = vadd.f32 %v1343, %v1412
    %v1414 = vpop.f32.mrb[0].mxu0
    %1415 = vdwg.mxu0
    %1416 = vmatprep.subr.mxu0 0.0
    %1417 = vmatpush1.msra.mxu0 %v918
    %1418 = vmatprep.subr.mxu0 0.0
    %1419 = vmatpush1.msra.mxu0 %v919
    %1420 = vmatprep.subr.mxu0 0.0
    %1421 = vmatpush1.msra.mxu0 %v920
    %1422 = vmatprep.subr.mxu0 0.0
    %1423 = vmatpush1.msra.mxu0 %v921
    %1424 = vmatprep.subr.mxu0 0.0
    %1425 = vmatpush1.msra.mxu0 %v922
    %1426 = vmatprep.subr.mxu0 0.0
    %1427 = vmatpush1.msra.mxu0 %v923
    %1428 = vmatprep.subr.mxu0 0.0
    %1429 = vmatpush1.msra.mxu0 %v924
    %1430 = vmatprep.subr.mxu0 0.0
    %1431 = vmatpush1.msra.mxu0 %v925
    %1432 = vmatprep.subr.mxu0 0.0
    %1433 = vmatpush1.msra.mxu0 %v926
    %1434 = vmatprep.subr.mxu0 0.0
    %1435 = vmatpush1.msra.mxu0 %v927
    %1436 = vmatprep.subr.mxu0 0.0
    %1437 = vmatpush1.msra.mxu0 %v928
    %1438 = vmatprep.subr.mxu0 0.0
    %1439 = vmatpush1.msra.mxu0 %v929
    %1440 = vmatprep.subr.mxu0 0.0
    %1441 = vmatpush1.msra.mxu0 %v930
    %1442 = vmatprep.subr.mxu0 0.0
    %1443 = vmatpush1.msra.mxu0 %v931
    %1444 = vmatprep.subr.mxu0 0.0
    %1445 = vmatpush1.msra.mxu0 %v932
    %1446 = vmatprep.subr.mxu0 0.0
    %1447 = vmatpush1.msra.mxu0 %v933
    %1448 = vmatprep.subr.mxu0 0.0
    %1449 = vmatpush1.msra.mxu0 %v934
    %1450 = vmatprep.subr.mxu0 0.0
    %1451 = vmatpush1.msra.mxu0 %v935
    %1452 = vmatprep.subr.mxu0 0.0
    %1453 = vmatpush1.msra.mxu0 %v936
    %1454 = vmatprep.subr.mxu0 0.0
    %1455 = vmatpush1.msra.mxu0 %v937
    %1456 = vmatprep.subr.mxu0 0.0
    %1457 = vmatpush1.msra.mxu0 %v938
    %1458 = vmatprep.subr.mxu0 0.0
    %1459 = vmatpush1.msra.mxu0 %v939
    %1460 = vmatprep.subr.mxu0 0.0
    %1461 = vmatpush1.msra.mxu0 %v940
    %1462 = vmatprep.subr.mxu0 0.0
    %1463 = vmatpush1.msra.mxu0 %v941
    %1464 = vmatprep.subr.mxu0 0.0
    %1465 = vmatpush1.msra.mxu0 %v942
    %1466 = vmatprep.subr.mxu0 0.0
    %1467 = vmatpush1.msra.mxu0 %v943
    %1468 = vmatprep.subr.mxu0 0.0
    %1469 = vmatpush1.msra.mxu0 %v944
    %1470 = vmatprep.subr.mxu0 0.0
    %1471 = vmatpush1.msra.mxu0 %v945
    %1472 = vmatprep.subr.mxu0 0.0
    %1473 = vmatpush1.msra.mxu0 %v946
    %1474 = vmatprep.subr.mxu0 0.0
    %1475 = vmatpush1.msra.mxu0 %v947
    %1476 = vmatprep.subr.mxu0 0.0
    %1477 = vmatpush1.msra.mxu0 %v948
    %1478 = vmatprep.subr.mxu0 0.0
    %1479 = vmatpush1.msra.mxu0 %v949
    %1480 = vmatprep.mubr.f32.mxu0 %v1190
    %1481 = vmatmul.mubr.f32.gmra.mrb[0].mxu0 %v1158
    %v1482 = vpop.f32.mrb[0].mxu0
    %v1483 = vadd.f32 %v1413, %v1482
    %v1484 = vpop.f32.mrb[0].mxu0
    %1485 = vdwg.mxu0
    %v1486 = vadd.f32 %v821, %v1483
    %vm1487 = vcmask 254976
    %1488 = vst.msk [vmem:[#allocation2] sm:$0x3] %vm1487, %v1486
    // Predicated region
    $region34: #{tpu_custom_call.1} parent=1 // pred_check
      %p1489 = pneg %p27
    $region35: #{tpu_custom_call.1} parent=1 // pred_check_branch
      %1491 = sbr.rel (%p1489) target = $region37
    $region36: #{tpu_custom_call.1} parent=1 // pred_region
      %v1492 = vld [vmem:[#allocation2] sm:$0x3]
      %v1493 = vld [vmem:[%s4] sm:$0xff]
      %v1494 = vld [vmem:[%s4 + $0x8] sm:$0xff]
      %v1495 = vld [vmem:[%s4 + $0x10] sm:$0xff]
      %v1496 = vld [vmem:[%s4 + $0x18] sm:$0xff]
      %v1497 = vld [vmem:[%s5] sm:$0x1]
      %v1499 = vlaneseq
      %v1500 = vshrl.u32 %v1499, 7
      %v1501 = vsub.s32 0, %v1500
      %v1502 = vrot.slane %v1497, %v1501
      %vm1504 = vcmask 261120
      %v1506 = vsel %vm1504, %v1492, 0
      %1508 = vmatprep.subr.mxu0 0.0
      %1509 = vmatpush1.msra.mxu0 %v1493
      %1510 = vmatprep.subr.mxu0 0.0
      %1511 = vmatpush1.msra.mxu0 %v1494
      %1512 = vmatprep.subr.mxu0 0.0
      %1513 = vmatpush1.msra.mxu0 %v1495
      %1514 = vmatprep.subr.mxu0 0.0
      %1515 = vmatpush1.msra.mxu0 %v1496
      %1516 = vmatprep.subr.mxu0 0.0
      %1517 = vmatpush1.msra.mxu0 0.0
      %1518 = vmatprep.subr.mxu0 0.0
      %1519 = vmatpush1.msra.mxu0 0.0
      %1520 = vmatprep.subr.mxu0 0.0
      %1521 = vmatpush1.msra.mxu0 0.0
      %1522 = vmatprep.subr.mxu0 0.0
      %1523 = vmatpush1.msra.mxu0 0.0
      %1524 = vmatprep.subr.mxu0 0.0
      %1525 = vmatpush1.msra.mxu0 0.0
      %1526 = vmatprep.subr.mxu0 0.0
      %1527 = vmatpush1.msra.mxu0 0.0
      %1528 = vmatprep.subr.mxu0 0.0
      %1529 = vmatpush1.msra.mxu0 0.0
      %1530 = vmatprep.subr.mxu0 0.0
      %1531 = vmatpush1.msra.mxu0 0.0
      %1532 = vmatprep.subr.mxu0 0.0
      %1533 = vmatpush1.msra.mxu0 0.0
      %1534 = vmatprep.subr.mxu0 0.0
      %1535 = vmatpush1.msra.mxu0 0.0
      %1536 = vmatprep.subr.mxu0 0.0
      %1537 = vmatpush1.msra.mxu0 0.0
      %1538 = vmatprep.subr.mxu0 0.0
      %1539 = vmatpush1.msra.mxu0 0.0
      %1540 = vmatprep.subr.mxu0 0.0
      %1541 = vmatpush1.msra.mxu0 0.0
      %1542 = vmatprep.subr.mxu0 0.0
      %1543 = vmatpush1.msra.mxu0 0.0
      %1544 = vmatprep.subr.mxu0 0.0
      %1545 = vmatpush1.msra.mxu0 0.0
      %1546 = vmatprep.subr.mxu0 0.0
      %1547 = vmatpush1.msra.mxu0 0.0
      %1548 = vmatprep.subr.mxu0 0.0
      %1549 = vmatpush1.msra.mxu0 0.0
      %1550 = vmatprep.subr.mxu0 0.0
      %1551 = vmatpush1.msra.mxu0 0.0
      %1552 = vmatprep.subr.mxu0 0.0
      %1553 = vmatpush1.msra.mxu0 0.0
      %1554 = vmatprep.subr.mxu0 0.0
      %1555 = vmatpush1.msra.mxu0 0.0
      %1556 = vmatprep.subr.mxu0 0.0
      %1557 = vmatpush1.msra.mxu0 0.0
      %1558 = vmatprep.subr.mxu0 0.0
      %1559 = vmatpush1.msra.mxu0 0.0
      %1560 = vmatprep.subr.mxu0 0.0
      %1561 = vmatpush1.msra.mxu0 0.0
      %1562 = vmatprep.subr.mxu0 0.0
      %1563 = vmatpush1.msra.mxu0 0.0
      %1564 = vmatprep.subr.mxu0 0.0
      %1565 = vmatpush1.msra.mxu0 0.0
      %1566 = vmatprep.subr.mxu0 0.0
      %1567 = vmatpush1.msra.mxu0 0.0
      %1568 = vmatprep.subr.mxu0 0.0
      %1569 = vmatpush1.msra.mxu0 0.0
      %1570 = vmatprep.subr.mxu0 0.0
      %1571 = vmatpush1.msra.mxu0 0.0
      %1572 = vmatprep.mubr.f32.mxu0 0.0
      %1573 = vmatmul.mubr.f32.gmra.mrb[0].mxu0 %v1506
      %v1574 = vpop.f32.mrb[0].mxu0
      %v1575 = vadd.f32 %v1502, %v1574
      %v1576 = vpop.f32.mrb[0].mxu0
      %1577 = vdwg.mxu0
      %v1578 = vmax.f32 %v1575, 0.0
      %v1579 = vld [vmem:[%s6] sm:$0xff]
      %v1580 = vld [vmem:[%s6 + $0x8] sm:$0xff]
      %v1581 = vld [vmem:[%s6 + $0x10] sm:$0xff]
      %v1582 = vld [vmem:[%s6 + $0x18] sm:$0xff]
      %v1584 = vsel %vm1504, %v1578, 0
      %1586 = vmatprep.subr.mxu0 0.0
      %1587 = vmatpush1.msra.mxu0 %v1579
      %1588 = vmatprep.subr.mxu0 0.0
      %1589 = vmatpush1.msra.mxu0 %v1580
      %1590 = vmatprep.subr.mxu0 0.0
      %1591 = vmatpush1.msra.mxu0 %v1581
      %1592 = vmatprep.subr.mxu0 0.0
      %1593 = vmatpush1.msra.mxu0 %v1582
      %1594 = vmatprep.subr.mxu0 0.0
      %1595 = vmatpush1.msra.mxu0 0.0
      %1596 = vmatprep.subr.mxu0 0.0
      %1597 = vmatpush1.msra.mxu0 0.0
      %1598 = vmatprep.subr.mxu0 0.0
      %1599 = vmatpush1.msra.mxu0 0.0
      %1600 = vmatprep.subr.mxu0 0.0
      %1601 = vmatpush1.msra.mxu0 0.0
      %1602 = vmatprep.subr.mxu0 0.0
      %1603 = vmatpush1.msra.mxu0 0.0
      %1604 = vmatprep.subr.mxu0 0.0
      %1605 = vmatpush1.msra.mxu0 0.0
      %1606 = vmatprep.subr.mxu0 0.0
      %1607 = vmatpush1.msra.mxu0 0.0
      %1608 = vmatprep.subr.mxu0 0.0
      %1609 = vmatpush1.msra.mxu0 0.0
      %1610 = vmatprep.subr.mxu0 0.0
      %1611 = vmatpush1.msra.mxu0 0.0
      %1612 = vmatprep.subr.mxu0 0.0
      %1613 = vmatpush1.msra.mxu0 0.0
      %1614 = vmatprep.subr.mxu0 0.0
      %1615 = vmatpush1.msra.mxu0 0.0
      %1616 = vmatprep.subr.mxu0 0.0
      %1617 = vmatpush1.msra.mxu0 0.0
      %1618 = vmatprep.subr.mxu0 0.0
      %1619 = vmatpush1.msra.mxu0 0.0
      %1620 = vmatprep.subr.mxu0 0.0
      %1621 = vmatpush1.msra.mxu0 0.0
      %1622 = vmatprep.subr.mxu0 0.0
      %1623 = vmatpush1.msra.mxu0 0.0
      %1624 = vmatprep.subr.mxu0 0.0
      %1625 = vmatpush1.msra.mxu0 0.0
      %1626 = vmatprep.subr.mxu0 0.0
      %1627 = vmatpush1.msra.mxu0 0.0
      %1628 = vmatprep.subr.mxu0 0.0
      %1629 = vmatpush1.msra.mxu0 0.0
      %1630 = vmatprep.subr.mxu0 0.0
      %1631 = vmatpush1.msra.mxu0 0.0
      %1632 = vmatprep.subr.mxu0 0.0
      %1633 = vmatpush1.msra.mxu0 0.0
      %1634 = vmatprep.subr.mxu0 0.0
      %1635 = vmatpush1.msra.mxu0 0.0
      %1636 = vmatprep.subr.mxu0 0.0
      %1637 = vmatpush1.msra.mxu0 0.0
      %1638 = vmatprep.subr.mxu0 0.0
      %1639 = vmatpush1.msra.mxu0 0.0
      %1640 = vmatprep.subr.mxu0 0.0
      %1641 = vmatpush1.msra.mxu0 0.0
      %1642 = vmatprep.subr.mxu0 0.0
      %1643 = vmatpush1.msra.mxu0 0.0
      %1644 = vmatprep.subr.mxu0 0.0
      %1645 = vmatpush1.msra.mxu0 0.0
      %1646 = vmatprep.subr.mxu0 0.0
      %1647 = vmatpush1.msra.mxu0 0.0
      %1648 = vmatprep.subr.mxu0 0.0
      %1649 = vmatpush1.msra.mxu0 0.0
      %1650 = vmatprep.mubr.f32.mxu0 0.0
      %1651 = vmatmul.mubr.f32.gmra.mrb[0].mxu0 %v1584
      %v1652 = vpop.f32.mrb[0].mxu0
      %v1653 = vadd.f32 0.0, %v1652
      %v1654 = vpop.f32.mrb[0].mxu0
      %1655 = vdwg.mxu0
      %1656 = vst.msk [vmem:[#allocation3] sm:$0x3] %vm1487, %v1653
    $region37: #{tpu_custom_call.1} parent=1 // pred_fallthru
      _
    // Predicated region
    $region38: #{tpu_custom_call.1} parent=1 // pred_check
      _
    $region39: #{tpu_custom_call.1} parent=1 // pred_check_branch
      %1658 = sbr.rel (0) target = $region41
    $region40: #{tpu_custom_call.1} parent=1 // pred_region
      %s1660 = ssub.s32 32, 32
      %1661 = vsyncadd [#allocation4], %s1660
      %s1663 = sshll.u32 [#allocation3], 4
      %s1664 = int_to_ptr.vmem [resolvable:$true] %s1663
      %1666 = dma.vmem_to_hbm [thread:$0]  %s1664, 32, %s7, [#allocation4]
    $region41: #{tpu_custom_call.1} parent=1 // pred_fallthru
      _
    // Predicated region
    $region42: #{tpu_custom_call.1} parent=1 // pred_check
      _
    $region43: #{tpu_custom_call.1} parent=1 // pred_check_branch
      %1668 = sbr.rel (0) target = $region45
    $region44: #{tpu_custom_call.1} parent=1 // pred_region
      %1669 = dma.done [#allocation4], 32
    $region45: #{tpu_custom_call.1} parent=1 // pred_fallthru
      _
    %1670 = vsyncpa [#allocation4], 1

</llo_original>
